<compile_context>
chip_gen: v6e
topology: v6e:2x2x1
jax: 0.10.0
libtpu: 0.0.40
codegen_flags: <defaults>
</compile_context>

<pallas_src>
import jax
import jax.numpy as jnp
from jax import lax
from jax.experimental import pallas as pl
from jax.experimental.pallas import tpu as pltpu

OH = OW = 14                 # conv output spatial dims for 28x28, k=3, s=2, p=1
NCH = 10                     # conv output channels
NTAP = 9                     # 3x3 kernel taps
NFEAT = NCH * OH * OW        # 1960 == fc in_features
NCLS = 10                    # fc out_features
PH = 15                      # phase-plane side: padded 30x30 split into 4 (15,15) planes
NPP = PH * PH                # 225 flattened plane positions (lane dim)
NQ = NPP - (PH + 1)          # 209: covers q = 15*oh + ow for all real outputs; the
                             # max tap offset is 16, so d + NQ <= 225 stays in bounds
BATCH_TILE = 512             # intersection of review ranges (v5e/v6e: 512-1024, v7x: 256-512)


def _fused_cnn_kernel(cw_ref, cb_ref, planes_ref, fw_ref, fb_ref, out_ref):
    """One batch tile of conv(3x3,s2,p1) + ReLU + NCHW-flatten + Linear + log_softmax.

    cw_ref     (90,)          SMEM  conv weight, cw[c*9 + kh*3 + kw]
    cb_ref     (10,)          SMEM  conv bias
    planes_ref (4, tb, 225)   VMEM  stride-2 phase planes of the padded input:
                                    planes[pr*2+pc, b, i*15+j] = xp[b, 2i+pr, 2j+pc]
    fw_ref     (10, 10, 209)  VMEM  fc weight expanded to the plane layout:
                                    fw[c, cls, 15*oh+ow] = fc_w[cls, c*196+14*oh+ow]
                                    (zero at the ow==14 "garbage" positions)
    fb_ref     (1, 10)        VMEM  fc bias
    out_ref    (tb, 10)       VMEM  output log-probs
    """
    tb = out_ref.shape[0]
    logits = jnp.zeros((tb, NCLS), jnp.float32)

    # tap (kh, kw) at output position q = 15*oh + ow is
    #   planes[(kh%2)*2 + (kw%2)][q + (kh//2)*15 + (kw//2)]
    for c in range(NCH):
        acc = None
        for kh in range(3):
            for kw in range(3):
                p = (kh % 2) * 2 + (kw % 2)
                d = (kh // 2) * PH + (kw // 2)
                # (tb, 209) lane-dense slab, loaded per (channel, tap) so only
                # ~one slab is live at a time (no 9-slab hoist -> no spills).
                tap = planes_ref[p, :, pl.ds(d, NQ)]
                w = cw_ref[c * NTAP + kh * 3 + kw]
                acc = tap * w if acc is None else acc + tap * w
        feat = jnp.maximum(acc + cb_ref[c], 0.0)           # ReLU'd conv channel c

        # Fused FC: contract the 209 plane positions against the matching
        # zero-padded fc-weight slab on the MXU (positions with ow==14 carry
        # zero weight and never contribute).  K=209, N=10 per channel.
        logits = logits + lax.dot_general(
            feat, fw_ref[c],
            dimension_numbers=(((1,), (1,)), ((), ())),
            preferred_element_type=jnp.float32)

    logits = logits + fb_ref[...]                           # (tb, 10)

    # log_softmax over the 10 classes.
    m = jnp.max(logits, axis=-1, keepdims=True)
    shifted = logits - m
    lse = jnp.log(jnp.sum(jnp.exp(shifted), axis=-1, keepdims=True))
    out_ref[...] = shifted - lse


def _round_up(v, m):
    return -(-v // m) * m


def _pick_batch_tile(B):
    """>=2 grid steps whenever the batch allows it (v7x: shard the "parallel"
    axis over both TensorCores), rows a multiple of 8 (f32 sublane tile),
    capped at BATCH_TILE so double-buffered inputs stay small even on v7x's
    64 MiB VMEM."""
    steps = max(2, pl.cdiv(B, BATCH_TILE)) if B >= 16 else 1
    return min(BATCH_TILE, max(8, _round_up(pl.cdiv(B, steps), 8)))


@jax.jit
def simple_cnn_forward(x, conv_w, conv_b, fc_w, fc_b):
    """x: (B, 1, 28, 28) float32, NCHW (as in the PyTorch module)."""
    B = x.shape[0]
    tb = _pick_batch_tile(B)
    Bp = _round_up(B, tb)

    # Pad the tiny raw input (batch pad for ragged tiles + conv padding of 1),
    # never the big intermediates.
    xp = jnp.pad(x[:, 0], ((0, Bp - B), (1, 1), (1, 1)))            # (Bp, 30, 30)

    # Space-to-depth: the 4 stride-2 phase planes, flattened to 225 lanes.
    #   planes[pr*2+pc, b, i*15+j] == xp[b, 2i+pr, 2j+pc]
    planes = (xp.reshape(Bp, PH, 2, PH, 2)
                .transpose(2, 4, 0, 1, 3)
                .reshape(4, Bp, NPP))                               # (4, Bp, 225)

    cw = conv_w.reshape(NCH * NTAP)                                 # (90,)  -> SMEM
    cb = conv_b                                                     # (10,)  -> SMEM

    # fc weight expanded to the in-kernel feature layout:
    #   fw_exp[c, cls, 15*oh + ow] = fc_w[cls, c*196 + 14*oh + ow]  (ow<=13), 0 at ow==14.
    fw4 = fc_w.reshape(NCLS, NCH, OH, OW)
    fw4 = jnp.pad(fw4, ((0, 0), (0, 0), (0, 0), (0, 1)))            # ow: 14 -> 15
    fw_exp = fw4.transpose(1, 0, 2, 3).reshape(NCH, NCLS, OH * PH)[:, :, :NQ]
    fb = fc_b.reshape(1, NCLS)

    # VMEM budget computed from the actual tile footprint (+ headroom), well
    # under v7x's 64 MiB and half of v5e/v6e's 128 MiB.
    planes_block_bytes = 4 * tb * NPP * 4
    feat_bytes = tb * NQ * 4
    fw_bytes = NCH * NCLS * NQ * 4
    vmem_limit = int(min(48 * 1024 * 1024,
                         max(16 * 1024 * 1024,
                             2 * planes_block_bytes + 6 * feat_bytes
                             + 2 * fw_bytes + 2 * tb * NCLS * 4 + (4 << 20))))

    out = pl.pallas_call(
        _fused_cnn_kernel,
        out_shape=jax.ShapeDtypeStruct((Bp, NCLS), jnp.float32),
        grid=(Bp // tb,),
        in_specs=[
            pl.BlockSpec(memory_space=pltpu.MemorySpace.SMEM),        # conv w (90,)
            pl.BlockSpec(memory_space=pltpu.MemorySpace.SMEM),        # conv b (10,)
            pl.BlockSpec((4, tb, NPP), lambda i: (0, i, 0)),          # phase planes
            pl.BlockSpec((NCH, NCLS, NQ), lambda i: (0, 0, 0)),       # fc w (expanded)
            pl.BlockSpec((1, NCLS), lambda i: (0, 0)),                # fc b
        ],
        out_specs=pl.BlockSpec((tb, NCLS), lambda i: (i, 0)),
        compiler_params=pltpu.CompilerParams(
            dimension_semantics=("parallel",),
            vmem_limit_bytes=vmem_limit),
    )(cw, cb, planes, fw_exp, fb)
    return out[:B]


# ---------------- pure-JAX reference (for verification) ----------------

def reference_forward(x, conv_w, conv_b, fc_w, fc_b):
    y = lax.conv_general_dilated(
        x, conv_w, window_strides=(2, 2), padding=((1, 1), (1, 1)),
        dimension_numbers=("NCHW", "OIHW", "NCHW"))
    y = y + conv_b[None, :, None, None]
    y = jnp.maximum(y, 0.0)
    y = y.reshape(x.shape[0], -1)
    logits = y @ fc_w.T + fc_b
    return jax.nn.log_softmax(logits, axis=-1)


if __name__ == "__main__":
    key = jax.random.PRNGKey(0)
    k_x, k_cw, k_cb, k_fw, k_fb = jax.random.split(key, 5)

    B = 2
    x = jax.random.normal(k_x, (B, 1, 28, 28), dtype=jnp.float32)

    # Shapes match nn.Conv2d(1, 10, 3, stride=2, padding=1) / nn.Linear(1960, 10)
    conv_w = jax.random.normal(k_cw, (10, 1, 3, 3), dtype=jnp.float32) * 0.2
    conv_b = jax.random.normal(k_cb, (10,), dtype=jnp.float32) * 0.1
    fc_w = jax.random.normal(k_fw, (NCLS, NFEAT), dtype=jnp.float32) * 0.05
    fc_b = jax.random.normal(k_fb, (NCLS,), dtype=jnp.float32) * 0.1

    out = jax.block_until_ready(simple_cnn_forward(x, conv_w, conv_b, fc_w, fc_b))

    ref = reference_forward(x, conv_w, conv_b, fc_w, fc_b)
    assert out.shape == (B, NCLS)
    assert jnp.allclose(out, ref, atol=1e-4, rtol=1e-4), (
        f"max abs err {float(jnp.max(jnp.abs(out - ref)))}")

    print("KERNEL_OK")
</pallas_src>

<mosaic_0001>
module attributes {stable_mosaic.version = 11 : i64} {
  func.func @_fused_cnn_kernel(%arg0: i32, %arg1: memref<90xf32, #tpu.memory_space<smem>>, %arg2: memref<10xf32, #tpu.memory_space<smem>>, %arg3: memref<4x8x225xf32, #tpu.memory_space<vmem>>, %arg4: memref<10x10x209xf32, #tpu.memory_space<vmem>>, %arg5: memref<1x10xf32, #tpu.memory_space<vmem>>, %arg6: memref<8x10xf32, #tpu.memory_space<vmem>>) attributes {dimension_semantics = [#tpu.dimension_semantics<parallel>], iteration_bounds = array<i64: 1>, scalar_prefetch = 0 : i64, scratch_operands = 0 : i64, tpu.core_type = #tpu.core_type<tc>, window_params = [{transform_indices = @transform_0, window_bounds = array<i64: 90>}, {transform_indices = @transform_1, window_bounds = array<i64: 10>}, {transform_indices = @transform_2, window_bounds = array<i64: 4, 8, 225>}, {pipeline_mode = #tpu.pipeline_mode<synchronous>, transform_indices = @transform_3, window_bounds = array<i64: 10, 10, 209>}, {pipeline_mode = #tpu.pipeline_mode<synchronous>, transform_indices = @transform_4, window_bounds = array<i64: 1, 10>}, {transform_indices = @transform_5, window_bounds = array<i64: 8, 10>}]} {
    %cst = arith.constant 0.000000e+00 : f32
    %0 = vector.broadcast %cst : f32 to vector<8x10xf32>
    %c0 = arith.constant 0 : index
    %c0_0 = arith.constant 0 : index
    %c0_1 = arith.constant 0 : index
    %1 = vector.load %arg3[%c0, %c0_0, %c0_1] : memref<4x8x225xf32, #tpu.memory_space<vmem>>, vector<1x8x209xf32>
    %2 = vector.shape_cast %1 : vector<1x8x209xf32> to vector<8x209xf32>
    %c0_2 = arith.constant 0 : index
    %3 = memref.load %arg1[%c0_2] : memref<90xf32, #tpu.memory_space<smem>>
    %4 = vector.broadcast %3 : f32 to vector<8x209xf32>
    %5 = arith.mulf %2, %4 : vector<8x209xf32>
    %c1 = arith.constant 1 : index
    %c0_3 = arith.constant 0 : index
    %c0_4 = arith.constant 0 : index
    %6 = vector.load %arg3[%c1, %c0_3, %c0_4] : memref<4x8x225xf32, #tpu.memory_space<vmem>>, vector<1x8x209xf32>
    %7 = vector.shape_cast %6 : vector<1x8x209xf32> to vector<8x209xf32>
    %c1_5 = arith.constant 1 : index
    %8 = memref.load %arg1[%c1_5] : memref<90xf32, #tpu.memory_space<smem>>
    %9 = vector.broadcast %8 : f32 to vector<8x209xf32>
    %10 = arith.mulf %7, %9 : vector<8x209xf32>
    %11 = arith.addf %5, %10 : vector<8x209xf32>
    %c0_6 = arith.constant 0 : index
    %c0_7 = arith.constant 0 : index
    %c1_8 = arith.constant 1 : index
    %12 = vector.load %arg3[%c0_6, %c0_7, %c1_8] : memref<4x8x225xf32, #tpu.memory_space<vmem>>, vector<1x8x209xf32>
    %13 = vector.shape_cast %12 : vector<1x8x209xf32> to vector<8x209xf32>
    %c2 = arith.constant 2 : index
    %14 = memref.load %arg1[%c2] : memref<90xf32, #tpu.memory_space<smem>>
    %15 = vector.broadcast %14 : f32 to vector<8x209xf32>
    %16 = arith.mulf %13, %15 : vector<8x209xf32>
    %17 = arith.addf %11, %16 : vector<8x209xf32>
    %c2_9 = arith.constant 2 : index
    %c0_10 = arith.constant 0 : index
    %c0_11 = arith.constant 0 : index
    %18 = vector.load %arg3[%c2_9, %c0_10, %c0_11] : memref<4x8x225xf32, #tpu.memory_space<vmem>>, vector<1x8x209xf32>
    %19 = vector.shape_cast %18 : vector<1x8x209xf32> to vector<8x209xf32>
    %c3 = arith.constant 3 : index
    %20 = memref.load %arg1[%c3] : memref<90xf32, #tpu.memory_space<smem>>
    %21 = vector.broadcast %20 : f32 to vector<8x209xf32>
    %22 = arith.mulf %19, %21 : vector<8x209xf32>
    %23 = arith.addf %17, %22 : vector<8x209xf32>
    %c3_12 = arith.constant 3 : index
    %c0_13 = arith.constant 0 : index
    %c0_14 = arith.constant 0 : index
    %24 = vector.load %arg3[%c3_12, %c0_13, %c0_14] : memref<4x8x225xf32, #tpu.memory_space<vmem>>, vector<1x8x209xf32>
    %25 = vector.shape_cast %24 : vector<1x8x209xf32> to vector<8x209xf32>
    %c4 = arith.constant 4 : index
    %26 = memref.load %arg1[%c4] : memref<90xf32, #tpu.memory_space<smem>>
    %27 = vector.broadcast %26 : f32 to vector<8x209xf32>
    %28 = arith.mulf %25, %27 : vector<8x209xf32>
    %29 = arith.addf %23, %28 : vector<8x209xf32>
    %c2_15 = arith.constant 2 : index
    %c0_16 = arith.constant 0 : index
    %c1_17 = arith.constant 1 : index
    %30 = vector.load %arg3[%c2_15, %c0_16, %c1_17] : memref<4x8x225xf32, #tpu.memory_space<vmem>>, vector<1x8x209xf32>
    %31 = vector.shape_cast %30 : vector<1x8x209xf32> to vector<8x209xf32>
    %c5 = arith.constant 5 : index
    %32 = memref.load %arg1[%c5] : memref<90xf32, #tpu.memory_space<smem>>
    %33 = vector.broadcast %32 : f32 to vector<8x209xf32>
    %34 = arith.mulf %31, %33 : vector<8x209xf32>
    %35 = arith.addf %29, %34 : vector<8x209xf32>
    %c0_18 = arith.constant 0 : index
    %c0_19 = arith.constant 0 : index
    %c15 = arith.constant 15 : index
    %36 = vector.load %arg3[%c0_18, %c0_19, %c15] : memref<4x8x225xf32, #tpu.memory_space<vmem>>, vector<1x8x209xf32>
    %37 = vector.shape_cast %36 : vector<1x8x209xf32> to vector<8x209xf32>
    %c6 = arith.constant 6 : index
    %38 = memref.load %arg1[%c6] : memref<90xf32, #tpu.memory_space<smem>>
    %39 = vector.broadcast %38 : f32 to vector<8x209xf32>
    %40 = arith.mulf %37, %39 : vector<8x209xf32>
    %41 = arith.addf %35, %40 : vector<8x209xf32>
    %c1_20 = arith.constant 1 : index
    %c0_21 = arith.constant 0 : index
    %c15_22 = arith.constant 15 : index
    %42 = vector.load %arg3[%c1_20, %c0_21, %c15_22] : memref<4x8x225xf32, #tpu.memory_space<vmem>>, vector<1x8x209xf32>
    %43 = vector.shape_cast %42 : vector<1x8x209xf32> to vector<8x209xf32>
    %c7 = arith.constant 7 : index
    %44 = memref.load %arg1[%c7] : memref<90xf32, #tpu.memory_space<smem>>
    %45 = vector.broadcast %44 : f32 to vector<8x209xf32>
    %46 = arith.mulf %43, %45 : vector<8x209xf32>
    %47 = arith.addf %41, %46 : vector<8x209xf32>
    %c0_23 = arith.constant 0 : index
    %c0_24 = arith.constant 0 : index
    %c16 = arith.constant 16 : index
    %48 = vector.load %arg3[%c0_23, %c0_24, %c16] : memref<4x8x225xf32, #tpu.memory_space<vmem>>, vector<1x8x209xf32>
    %49 = vector.shape_cast %48 : vector<1x8x209xf32> to vector<8x209xf32>
    %c8 = arith.constant 8 : index
    %50 = memref.load %arg1[%c8] : memref<90xf32, #tpu.memory_space<smem>>
    %51 = vector.broadcast %50 : f32 to vector<8x209xf32>
    %52 = arith.mulf %49, %51 : vector<8x209xf32>
    %53 = arith.addf %47, %52 : vector<8x209xf32>
    %c0_25 = arith.constant 0 : index
    %54 = memref.load %arg2[%c0_25] : memref<10xf32, #tpu.memory_space<smem>>
    %55 = vector.broadcast %54 : f32 to vector<8x209xf32>
    %56 = arith.addf %53, %55 : vector<8x209xf32>
    %cst_26 = arith.constant 0.000000e+00 : f32
    %57 = vector.broadcast %cst_26 : f32 to vector<8x209xf32>
    %58 = arith.maximumf %56, %57 : vector<8x209xf32>
    %c0_27 = arith.constant 0 : index
    %c0_28 = arith.constant 0 : index
    %c0_29 = arith.constant 0 : index
    %59 = vector.load %arg4[%c0_27, %c0_28, %c0_29] : memref<10x10x209xf32, #tpu.memory_space<vmem>>, vector<1x10x209xf32>
    %60 = vector.shape_cast %59 : vector<1x10x209xf32> to vector<10x209xf32>
    %cst_30 = arith.constant dense<0.000000e+00> : vector<8x10xf32>
    %61 = tpu.matmul %58, %60, %cst_30 {dimension_numbers = #tpu.dot_dimension_numbers<[1], [1], [0], [0], [0, 0, 1, 0], [], []>} : vector<8x209xf32>, vector<10x209xf32>, vector<8x10xf32> -> vector<8x10xf32>
    %62 = arith.addf %0, %61 : vector<8x10xf32>
    %c0_31 = arith.constant 0 : index
    %c0_32 = arith.constant 0 : index
    %c0_33 = arith.constant 0 : index
    %63 = vector.load %arg3[%c0_31, %c0_32, %c0_33] : memref<4x8x225xf32, #tpu.memory_space<vmem>>, vector<1x8x209xf32>
    %64 = vector.shape_cast %63 : vector<1x8x209xf32> to vector<8x209xf32>
    %c9 = arith.constant 9 : index
    %65 = memref.load %arg1[%c9] : memref<90xf32, #tpu.memory_space<smem>>
    %66 = vector.broadcast %65 : f32 to vector<8x209xf32>
    %67 = arith.mulf %64, %66 : vector<8x209xf32>
    %c1_34 = arith.constant 1 : index
    %c0_35 = arith.constant 0 : index
    %c0_36 = arith.constant 0 : index
    %68 = vector.load %arg3[%c1_34, %c0_35, %c0_36] : memref<4x8x225xf32, #tpu.memory_space<vmem>>, vector<1x8x209xf32>
    %69 = vector.shape_cast %68 : vector<1x8x209xf32> to vector<8x209xf32>
    %c10 = arith.constant 10 : index
    %70 = memref.load %arg1[%c10] : memref<90xf32, #tpu.memory_space<smem>>
    %71 = vector.broadcast %70 : f32 to vector<8x209xf32>
    %72 = arith.mulf %69, %71 : vector<8x209xf32>
    %73 = arith.addf %67, %72 : vector<8x209xf32>
    %c0_37 = arith.constant 0 : index
    %c0_38 = arith.constant 0 : index
    %c1_39 = arith.constant 1 : index
    %74 = vector.load %arg3[%c0_37, %c0_38, %c1_39] : memref<4x8x225xf32, #tpu.memory_space<vmem>>, vector<1x8x209xf32>
    %75 = vector.shape_cast %74 : vector<1x8x209xf32> to vector<8x209xf32>
    %c11 = arith.constant 11 : index
    %76 = memref.load %arg1[%c11] : memref<90xf32, #tpu.memory_space<smem>>
    %77 = vector.broadcast %76 : f32 to vector<8x209xf32>
    %78 = arith.mulf %75, %77 : vector<8x209xf32>
    %79 = arith.addf %73, %78 : vector<8x209xf32>
    %c2_40 = arith.constant 2 : index
    %c0_41 = arith.constant 0 : index
    %c0_42 = arith.constant 0 : index
    %80 = vector.load %arg3[%c2_40, %c0_41, %c0_42] : memref<4x8x225xf32, #tpu.memory_space<vmem>>, vector<1x8x209xf32>
    %81 = vector.shape_cast %80 : vector<1x8x209xf32> to vector<8x209xf32>
    %c12 = arith.constant 12 : index
    %82 = memref.load %arg1[%c12] : memref<90xf32, #tpu.memory_space<smem>>
    %83 = vector.broadcast %82 : f32 to vector<8x209xf32>
    %84 = arith.mulf %81, %83 : vector<8x209xf32>
    %85 = arith.addf %79, %84 : vector<8x209xf32>
    %c3_43 = arith.constant 3 : index
    %c0_44 = arith.constant 0 : index
    %c0_45 = arith.constant 0 : index
    %86 = vector.load %arg3[%c3_43, %c0_44, %c0_45] : memref<4x8x225xf32, #tpu.memory_space<vmem>>, vector<1x8x209xf32>
    %87 = vector.shape_cast %86 : vector<1x8x209xf32> to vector<8x209xf32>
    %c13 = arith.constant 13 : index
    %88 = memref.load %arg1[%c13] : memref<90xf32, #tpu.memory_space<smem>>
    %89 = vector.broadcast %88 : f32 to vector<8x209xf32>
    %90 = arith.mulf %87, %89 : vector<8x209xf32>
    %91 = arith.addf %85, %90 : vector<8x209xf32>
    %c2_46 = arith.constant 2 : index
    %c0_47 = arith.constant 0 : index
    %c1_48 = arith.constant 1 : index
    %92 = vector.load %arg3[%c2_46, %c0_47, %c1_48] : memref<4x8x225xf32, #tpu.memory_space<vmem>>, vector<1x8x209xf32>
    %93 = vector.shape_cast %92 : vector<1x8x209xf32> to vector<8x209xf32>
    %c14 = arith.constant 14 : index
    %94 = memref.load %arg1[%c14] : memref<90xf32, #tpu.memory_space<smem>>
    %95 = vector.broadcast %94 : f32 to vector<8x209xf32>
    %96 = arith.mulf %93, %95 : vector<8x209xf32>
    %97 = arith.addf %91, %96 : vector<8x209xf32>
    %c0_49 = arith.constant 0 : index
    %c0_50 = arith.constant 0 : index
    %c15_51 = arith.constant 15 : index
    %98 = vector.load %arg3[%c0_49, %c0_50, %c15_51] : memref<4x8x225xf32, #tpu.memory_space<vmem>>, vector<1x8x209xf32>
    %99 = vector.shape_cast %98 : vector<1x8x209xf32> to vector<8x209xf32>
    %c15_52 = arith.constant 15 : index
    %100 = memref.load %arg1[%c15_52] : memref<90xf32, #tpu.memory_space<smem>>
    %101 = vector.broadcast %100 : f32 to vector<8x209xf32>
    %102 = arith.mulf %99, %101 : vector<8x209xf32>
    %103 = arith.addf %97, %102 : vector<8x209xf32>
    %c1_53 = arith.constant 1 : index
    %c0_54 = arith.constant 0 : index
    %c15_55 = arith.constant 15 : index
    %104 = vector.load %arg3[%c1_53, %c0_54, %c15_55] : memref<4x8x225xf32, #tpu.memory_space<vmem>>, vector<1x8x209xf32>
    %105 = vector.shape_cast %104 : vector<1x8x209xf32> to vector<8x209xf32>
    %c16_56 = arith.constant 16 : index
    %106 = memref.load %arg1[%c16_56] : memref<90xf32, #tpu.memory_space<smem>>
    %107 = vector.broadcast %106 : f32 to vector<8x209xf32>
    %108 = arith.mulf %105, %107 : vector<8x209xf32>
    %109 = arith.addf %103, %108 : vector<8x209xf32>
    %c0_57 = arith.constant 0 : index
    %c0_58 = arith.constant 0 : index
    %c16_59 = arith.constant 16 : index
    %110 = vector.load %arg3[%c0_57, %c0_58, %c16_59] : memref<4x8x225xf32, #tpu.memory_space<vmem>>, vector<1x8x209xf32>
    %111 = vector.shape_cast %110 : vector<1x8x209xf32> to vector<8x209xf32>
    %c17 = arith.constant 17 : index
    %112 = memref.load %arg1[%c17] : memref<90xf32, #tpu.memory_space<smem>>
    %113 = vector.broadcast %112 : f32 to vector<8x209xf32>
    %114 = arith.mulf %111, %113 : vector<8x209xf32>
    %115 = arith.addf %109, %114 : vector<8x209xf32>
    %c1_60 = arith.constant 1 : index
    %116 = memref.load %arg2[%c1_60] : memref<10xf32, #tpu.memory_space<smem>>
    %117 = vector.broadcast %116 : f32 to vector<8x209xf32>
    %118 = arith.addf %115, %117 : vector<8x209xf32>
    %cst_61 = arith.constant 0.000000e+00 : f32
    %119 = vector.broadcast %cst_61 : f32 to vector<8x209xf32>
    %120 = arith.maximumf %118, %119 : vector<8x209xf32>
    %c1_62 = arith.constant 1 : index
    %c0_63 = arith.constant 0 : index
    %c0_64 = arith.constant 0 : index
    %121 = vector.load %arg4[%c1_62, %c0_63, %c0_64] : memref<10x10x209xf32, #tpu.memory_space<vmem>>, vector<1x10x209xf32>
    %122 = vector.shape_cast %121 : vector<1x10x209xf32> to vector<10x209xf32>
    %cst_65 = arith.constant dense<0.000000e+00> : vector<8x10xf32>
    %123 = tpu.matmul %120, %122, %cst_65 {dimension_numbers = #tpu.dot_dimension_numbers<[1], [1], [0], [0], [0, 0, 1, 0], [], []>} : vector<8x209xf32>, vector<10x209xf32>, vector<8x10xf32> -> vector<8x10xf32>
    %124 = arith.addf %62, %123 : vector<8x10xf32>
    %c0_66 = arith.constant 0 : index
    %c0_67 = arith.constant 0 : index
    %c0_68 = arith.constant 0 : index
    %125 = vector.load %arg3[%c0_66, %c0_67, %c0_68] : memref<4x8x225xf32, #tpu.memory_space<vmem>>, vector<1x8x209xf32>
    %126 = vector.shape_cast %125 : vector<1x8x209xf32> to vector<8x209xf32>
    %c18 = arith.constant 18 : index
    %127 = memref.load %arg1[%c18] : memref<90xf32, #tpu.memory_space<smem>>
    %128 = vector.broadcast %127 : f32 to vector<8x209xf32>
    %129 = arith.mulf %126, %128 : vector<8x209xf32>
    %c1_69 = arith.constant 1 : index
    %c0_70 = arith.constant 0 : index
    %c0_71 = arith.constant 0 : index
    %130 = vector.load %arg3[%c1_69, %c0_70, %c0_71] : memref<4x8x225xf32, #tpu.memory_space<vmem>>, vector<1x8x209xf32>
    %131 = vector.shape_cast %130 : vector<1x8x209xf32> to vector<8x209xf32>
    %c19 = arith.constant 19 : index
    %132 = memref.load %arg1[%c19] : memref<90xf32, #tpu.memory_space<smem>>
    %133 = vector.broadcast %132 : f32 to vector<8x209xf32>
    %134 = arith.mulf %131, %133 : vector<8x209xf32>
    %135 = arith.addf %129, %134 : vector<8x209xf32>
    %c0_72 = arith.constant 0 : index
    %c0_73 = arith.constant 0 : index
    %c1_74 = arith.constant 1 : index
    %136 = vector.load %arg3[%c0_72, %c0_73, %c1_74] : memref<4x8x225xf32, #tpu.memory_space<vmem>>, vector<1x8x209xf32>
    %137 = vector.shape_cast %136 : vector<1x8x209xf32> to vector<8x209xf32>
    %c20 = arith.constant 20 : index
    %138 = memref.load %arg1[%c20] : memref<90xf32, #tpu.memory_space<smem>>
    %139 = vector.broadcast %138 : f32 to vector<8x209xf32>
    %140 = arith.mulf %137, %139 : vector<8x209xf32>
    %141 = arith.addf %135, %140 : vector<8x209xf32>
    %c2_75 = arith.constant 2 : index
    %c0_76 = arith.constant 0 : index
    %c0_77 = arith.constant 0 : index
    %142 = vector.load %arg3[%c2_75, %c0_76, %c0_77] : memref<4x8x225xf32, #tpu.memory_space<vmem>>, vector<1x8x209xf32>
    %143 = vector.shape_cast %142 : vector<1x8x209xf32> to vector<8x209xf32>
    %c21 = arith.constant 21 : index
    %144 = memref.load %arg1[%c21] : memref<90xf32, #tpu.memory_space<smem>>
    %145 = vector.broadcast %144 : f32 to vector<8x209xf32>
    %146 = arith.mulf %143, %145 : vector<8x209xf32>
    %147 = arith.addf %141, %146 : vector<8x209xf32>
    %c3_78 = arith.constant 3 : index
    %c0_79 = arith.constant 0 : index
    %c0_80 = arith.constant 0 : index
    %148 = vector.load %arg3[%c3_78, %c0_79, %c0_80] : memref<4x8x225xf32, #tpu.memory_space<vmem>>, vector<1x8x209xf32>
    %149 = vector.shape_cast %148 : vector<1x8x209xf32> to vector<8x209xf32>
    %c22 = arith.constant 22 : index
    %150 = memref.load %arg1[%c22] : memref<90xf32, #tpu.memory_space<smem>>
    %151 = vector.broadcast %150 : f32 to vector<8x209xf32>
    %152 = arith.mulf %149, %151 : vector<8x209xf32>
    %153 = arith.addf %147, %152 : vector<8x209xf32>
    %c2_81 = arith.constant 2 : index
    %c0_82 = arith.constant 0 : index
    %c1_83 = arith.constant 1 : index
    %154 = vector.load %arg3[%c2_81, %c0_82, %c1_83] : memref<4x8x225xf32, #tpu.memory_space<vmem>>, vector<1x8x209xf32>
    %155 = vector.shape_cast %154 : vector<1x8x209xf32> to vector<8x209xf32>
    %c23 = arith.constant 23 : index
    %156 = memref.load %arg1[%c23] : memref<90xf32, #tpu.memory_space<smem>>
    %157 = vector.broadcast %156 : f32 to vector<8x209xf32>
    %158 = arith.mulf %155, %157 : vector<8x209xf32>
    %159 = arith.addf %153, %158 : vector<8x209xf32>
    %c0_84 = arith.constant 0 : index
    %c0_85 = arith.constant 0 : index
    %c15_86 = arith.constant 15 : index
    %160 = vector.load %arg3[%c0_84, %c0_85, %c15_86] : memref<4x8x225xf32, #tpu.memory_space<vmem>>, vector<1x8x209xf32>
    %161 = vector.shape_cast %160 : vector<1x8x209xf32> to vector<8x209xf32>
    %c24 = arith.constant 24 : index
    %162 = memref.load %arg1[%c24] : memref<90xf32, #tpu.memory_space<smem>>
    %163 = vector.broadcast %162 : f32 to vector<8x209xf32>
    %164 = arith.mulf %161, %163 : vector<8x209xf32>
    %165 = arith.addf %159, %164 : vector<8x209xf32>
    %c1_87 = arith.constant 1 : index
    %c0_88 = arith.constant 0 : index
    %c15_89 = arith.constant 15 : index
    %166 = vector.load %arg3[%c1_87, %c0_88, %c15_89] : memref<4x8x225xf32, #tpu.memory_space<vmem>>, vector<1x8x209xf32>
    %167 = vector.shape_cast %166 : vector<1x8x209xf32> to vector<8x209xf32>
    %c25 = arith.constant 25 : index
    %168 = memref.load %arg1[%c25] : memref<90xf32, #tpu.memory_space<smem>>
    %169 = vector.broadcast %168 : f32 to vector<8x209xf32>
    %170 = arith.mulf %167, %169 : vector<8x209xf32>
    %171 = arith.addf %165, %170 : vector<8x209xf32>
    %c0_90 = arith.constant 0 : index
    %c0_91 = arith.constant 0 : index
    %c16_92 = arith.constant 16 : index
    %172 = vector.load %arg3[%c0_90, %c0_91, %c16_92] : memref<4x8x225xf32, #tpu.memory_space<vmem>>, vector<1x8x209xf32>
    %173 = vector.shape_cast %172 : vector<1x8x209xf32> to vector<8x209xf32>
    %c26 = arith.constant 26 : index
    %174 = memref.load %arg1[%c26] : memref<90xf32, #tpu.memory_space<smem>>
    %175 = vector.broadcast %174 : f32 to vector<8x209xf32>
    %176 = arith.mulf %173, %175 : vector<8x209xf32>
    %177 = arith.addf %171, %176 : vector<8x209xf32>
    %c2_93 = arith.constant 2 : index
    %178 = memref.load %arg2[%c2_93] : memref<10xf32, #tpu.memory_space<smem>>
    %179 = vector.broadcast %178 : f32 to vector<8x209xf32>
    %180 = arith.addf %177, %179 : vector<8x209xf32>
    %cst_94 = arith.constant 0.000000e+00 : f32
    %181 = vector.broadcast %cst_94 : f32 to vector<8x209xf32>
    %182 = arith.maximumf %180, %181 : vector<8x209xf32>
    %c2_95 = arith.constant 2 : index
    %c0_96 = arith.constant 0 : index
    %c0_97 = arith.constant 0 : index
    %183 = vector.load %arg4[%c2_95, %c0_96, %c0_97] : memref<10x10x209xf32, #tpu.memory_space<vmem>>, vector<1x10x209xf32>
    %184 = vector.shape_cast %183 : vector<1x10x209xf32> to vector<10x209xf32>
    %cst_98 = arith.constant dense<0.000000e+00> : vector<8x10xf32>
    %185 = tpu.matmul %182, %184, %cst_98 {dimension_numbers = #tpu.dot_dimension_numbers<[1], [1], [0], [0], [0, 0, 1, 0], [], []>} : vector<8x209xf32>, vector<10x209xf32>, vector<8x10xf32> -> vector<8x10xf32>
    %186 = arith.addf %124, %185 : vector<8x10xf32>
    %c0_99 = arith.constant 0 : index
    %c0_100 = arith.constant 0 : index
    %c0_101 = arith.constant 0 : index
    %187 = vector.load %arg3[%c0_99, %c0_100, %c0_101] : memref<4x8x225xf32, #tpu.memory_space<vmem>>, vector<1x8x209xf32>
    %188 = vector.shape_cast %187 : vector<1x8x209xf32> to vector<8x209xf32>
    %c27 = arith.constant 27 : index
    %189 = memref.load %arg1[%c27] : memref<90xf32, #tpu.memory_space<smem>>
    %190 = vector.broadcast %189 : f32 to vector<8x209xf32>
    %191 = arith.mulf %188, %190 : vector<8x209xf32>
    %c1_102 = arith.constant 1 : index
    %c0_103 = arith.constant 0 : index
    %c0_104 = arith.constant 0 : index
    %192 = vector.load %arg3[%c1_102, %c0_103, %c0_104] : memref<4x8x225xf32, #tpu.memory_space<vmem>>, vector<1x8x209xf32>
    %193 = vector.shape_cast %192 : vector<1x8x209xf32> to vector<8x209xf32>
    %c28 = arith.constant 28 : index
    %194 = memref.load %arg1[%c28] : memref<90xf32, #tpu.memory_space<smem>>
    %195 = vector.broadcast %194 : f32 to vector<8x209xf32>
    %196 = arith.mulf %193, %195 : vector<8x209xf32>
    %197 = arith.addf %191, %196 : vector<8x209xf32>
    %c0_105 = arith.constant 0 : index
    %c0_106 = arith.constant 0 : index
    %c1_107 = arith.constant 1 : index
    %198 = vector.load %arg3[%c0_105, %c0_106, %c1_107] : memref<4x8x225xf32, #tpu.memory_space<vmem>>, vector<1x8x209xf32>
    %199 = vector.shape_cast %198 : vector<1x8x209xf32> to vector<8x209xf32>
    %c29 = arith.constant 29 : index
    %200 = memref.load %arg1[%c29] : memref<90xf32, #tpu.memory_space<smem>>
    %201 = vector.broadcast %200 : f32 to vector<8x209xf32>
    %202 = arith.mulf %199, %201 : vector<8x209xf32>
    %203 = arith.addf %197, %202 : vector<8x209xf32>
    %c2_108 = arith.constant 2 : index
    %c0_109 = arith.constant 0 : index
    %c0_110 = arith.constant 0 : index
    %204 = vector.load %arg3[%c2_108, %c0_109, %c0_110] : memref<4x8x225xf32, #tpu.memory_space<vmem>>, vector<1x8x209xf32>
    %205 = vector.shape_cast %204 : vector<1x8x209xf32> to vector<8x209xf32>
    %c30 = arith.constant 30 : index
    %206 = memref.load %arg1[%c30] : memref<90xf32, #tpu.memory_space<smem>>
    %207 = vector.broadcast %206 : f32 to vector<8x209xf32>
    %208 = arith.mulf %205, %207 : vector<8x209xf32>
    %209 = arith.addf %203, %208 : vector<8x209xf32>
    %c3_111 = arith.constant 3 : index
    %c0_112 = arith.constant 0 : index
    %c0_113 = arith.constant 0 : index
    %210 = vector.load %arg3[%c3_111, %c0_112, %c0_113] : memref<4x8x225xf32, #tpu.memory_space<vmem>>, vector<1x8x209xf32>
    %211 = vector.shape_cast %210 : vector<1x8x209xf32> to vector<8x209xf32>
    %c31 = arith.constant 31 : index
    %212 = memref.load %arg1[%c31] : memref<90xf32, #tpu.memory_space<smem>>
    %213 = vector.broadcast %212 : f32 to vector<8x209xf32>
    %214 = arith.mulf %211, %213 : vector<8x209xf32>
    %215 = arith.addf %209, %214 : vector<8x209xf32>
    %c2_114 = arith.constant 2 : index
    %c0_115 = arith.constant 0 : index
    %c1_116 = arith.constant 1 : index
    %216 = vector.load %arg3[%c2_114, %c0_115, %c1_116] : memref<4x8x225xf32, #tpu.memory_space<vmem>>, vector<1x8x209xf32>
    %217 = vector.shape_cast %216 : vector<1x8x209xf32> to vector<8x209xf32>
    %c32 = arith.constant 32 : index
    %218 = memref.load %arg1[%c32] : memref<90xf32, #tpu.memory_space<smem>>
    %219 = vector.broadcast %218 : f32 to vector<8x209xf32>
    %220 = arith.mulf %217, %219 : vector<8x209xf32>
    %221 = arith.addf %215, %220 : vector<8x209xf32>
    %c0_117 = arith.constant 0 : index
    %c0_118 = arith.constant 0 : index
    %c15_119 = arith.constant 15 : index
    %222 = vector.load %arg3[%c0_117, %c0_118, %c15_119] : memref<4x8x225xf32, #tpu.memory_space<vmem>>, vector<1x8x209xf32>
    %223 = vector.shape_cast %222 : vector<1x8x209xf32> to vector<8x209xf32>
    %c33 = arith.constant 33 : index
    %224 = memref.load %arg1[%c33] : memref<90xf32, #tpu.memory_space<smem>>
    %225 = vector.broadcast %224 : f32 to vector<8x209xf32>
    %226 = arith.mulf %223, %225 : vector<8x209xf32>
    %227 = arith.addf %221, %226 : vector<8x209xf32>
    %c1_120 = arith.constant 1 : index
    %c0_121 = arith.constant 0 : index
    %c15_122 = arith.constant 15 : index
    %228 = vector.load %arg3[%c1_120, %c0_121, %c15_122] : memref<4x8x225xf32, #tpu.memory_space<vmem>>, vector<1x8x209xf32>
    %229 = vector.shape_cast %228 : vector<1x8x209xf32> to vector<8x209xf32>
    %c34 = arith.constant 34 : index
    %230 = memref.load %arg1[%c34] : memref<90xf32, #tpu.memory_space<smem>>
    %231 = vector.broadcast %230 : f32 to vector<8x209xf32>
    %232 = arith.mulf %229, %231 : vector<8x209xf32>
    %233 = arith.addf %227, %232 : vector<8x209xf32>
    %c0_123 = arith.constant 0 : index
    %c0_124 = arith.constant 0 : index
    %c16_125 = arith.constant 16 : index
    %234 = vector.load %arg3[%c0_123, %c0_124, %c16_125] : memref<4x8x225xf32, #tpu.memory_space<vmem>>, vector<1x8x209xf32>
    %235 = vector.shape_cast %234 : vector<1x8x209xf32> to vector<8x209xf32>
    %c35 = arith.constant 35 : index
    %236 = memref.load %arg1[%c35] : memref<90xf32, #tpu.memory_space<smem>>
    %237 = vector.broadcast %236 : f32 to vector<8x209xf32>
    %238 = arith.mulf %235, %237 : vector<8x209xf32>
    %239 = arith.addf %233, %238 : vector<8x209xf32>
    %c3_126 = arith.constant 3 : index
    %240 = memref.load %arg2[%c3_126] : memref<10xf32, #tpu.memory_space<smem>>
    %241 = vector.broadcast %240 : f32 to vector<8x209xf32>
    %242 = arith.addf %239, %241 : vector<8x209xf32>
    %cst_127 = arith.constant 0.000000e+00 : f32
    %243 = vector.broadcast %cst_127 : f32 to vector<8x209xf32>
    %244 = arith.maximumf %242, %243 : vector<8x209xf32>
    %c3_128 = arith.constant 3 : index
    %c0_129 = arith.constant 0 : index
    %c0_130 = arith.constant 0 : index
    %245 = vector.load %arg4[%c3_128, %c0_129, %c0_130] : memref<10x10x209xf32, #tpu.memory_space<vmem>>, vector<1x10x209xf32>
    %246 = vector.shape_cast %245 : vector<1x10x209xf32> to vector<10x209xf32>
    %cst_131 = arith.constant dense<0.000000e+00> : vector<8x10xf32>
    %247 = tpu.matmul %244, %246, %cst_131 {dimension_numbers = #tpu.dot_dimension_numbers<[1], [1], [0], [0], [0, 0, 1, 0], [], []>} : vector<8x209xf32>, vector<10x209xf32>, vector<8x10xf32> -> vector<8x10xf32>
    %248 = arith.addf %186, %247 : vector<8x10xf32>
    %c0_132 = arith.constant 0 : index
    %c0_133 = arith.constant 0 : index
    %c0_134 = arith.constant 0 : index
    %249 = vector.load %arg3[%c0_132, %c0_133, %c0_134] : memref<4x8x225xf32, #tpu.memory_space<vmem>>, vector<1x8x209xf32>
    %250 = vector.shape_cast %249 : vector<1x8x209xf32> to vector<8x209xf32>
    %c36 = arith.constant 36 : index
    %251 = memref.load %arg1[%c36] : memref<90xf32, #tpu.memory_space<smem>>
    %252 = vector.broadcast %251 : f32 to vector<8x209xf32>
    %253 = arith.mulf %250, %252 : vector<8x209xf32>
    %c1_135 = arith.constant 1 : index
    %c0_136 = arith.constant 0 : index
    %c0_137 = arith.constant 0 : index
    %254 = vector.load %arg3[%c1_135, %c0_136, %c0_137] : memref<4x8x225xf32, #tpu.memory_space<vmem>>, vector<1x8x209xf32>
    %255 = vector.shape_cast %254 : vector<1x8x209xf32> to vector<8x209xf32>
    %c37 = arith.constant 37 : index
    %256 = memref.load %arg1[%c37] : memref<90xf32, #tpu.memory_space<smem>>
    %257 = vector.broadcast %256 : f32 to vector<8x209xf32>
    %258 = arith.mulf %255, %257 : vector<8x209xf32>
    %259 = arith.addf %253, %258 : vector<8x209xf32>
    %c0_138 = arith.constant 0 : index
    %c0_139 = arith.constant 0 : index
    %c1_140 = arith.constant 1 : index
    %260 = vector.load %arg3[%c0_138, %c0_139, %c1_140] : memref<4x8x225xf32, #tpu.memory_space<vmem>>, vector<1x8x209xf32>
    %261 = vector.shape_cast %260 : vector<1x8x209xf32> to vector<8x209xf32>
    %c38 = arith.constant 38 : index
    %262 = memref.load %arg1[%c38] : memref<90xf32, #tpu.memory_space<smem>>
    %263 = vector.broadcast %262 : f32 to vector<8x209xf32>
    %264 = arith.mulf %261, %263 : vector<8x209xf32>
    %265 = arith.addf %259, %264 : vector<8x209xf32>
    %c2_141 = arith.constant 2 : index
    %c0_142 = arith.constant 0 : index
    %c0_143 = arith.constant 0 : index
    %266 = vector.load %arg3[%c2_141, %c0_142, %c0_143] : memref<4x8x225xf32, #tpu.memory_space<vmem>>, vector<1x8x209xf32>
    %267 = vector.shape_cast %266 : vector<1x8x209xf32> to vector<8x209xf32>
    %c39 = arith.constant 39 : index
    %268 = memref.load %arg1[%c39] : memref<90xf32, #tpu.memory_space<smem>>
    %269 = vector.broadcast %268 : f32 to vector<8x209xf32>
    %270 = arith.mulf %267, %269 : vector<8x209xf32>
    %271 = arith.addf %265, %270 : vector<8x209xf32>
    %c3_144 = arith.constant 3 : index
    %c0_145 = arith.constant 0 : index
    %c0_146 = arith.constant 0 : index
    %272 = vector.load %arg3[%c3_144, %c0_145, %c0_146] : memref<4x8x225xf32, #tpu.memory_space<vmem>>, vector<1x8x209xf32>
    %273 = vector.shape_cast %272 : vector<1x8x209xf32> to vector<8x209xf32>
    %c40 = arith.constant 40 : index
    %274 = memref.load %arg1[%c40] : memref<90xf32, #tpu.memory_space<smem>>
    %275 = vector.broadcast %274 : f32 to vector<8x209xf32>
    %276 = arith.mulf %273, %275 : vector<8x209xf32>
    %277 = arith.addf %271, %276 : vector<8x209xf32>
    %c2_147 = arith.constant 2 : index
    %c0_148 = arith.constant 0 : index
    %c1_149 = arith.constant 1 : index
    %278 = vector.load %arg3[%c2_147, %c0_148, %c1_149] : memref<4x8x225xf32, #tpu.memory_space<vmem>>, vector<1x8x209xf32>
    %279 = vector.shape_cast %278 : vector<1x8x209xf32> to vector<8x209xf32>
    %c41 = arith.constant 41 : index
    %280 = memref.load %arg1[%c41] : memref<90xf32, #tpu.memory_space<smem>>
    %281 = vector.broadcast %280 : f32 to vector<8x209xf32>
    %282 = arith.mulf %279, %281 : vector<8x209xf32>
    %283 = arith.addf %277, %282 : vector<8x209xf32>
    %c0_150 = arith.constant 0 : index
    %c0_151 = arith.constant 0 : index
    %c15_152 = arith.constant 15 : index
    %284 = vector.load %arg3[%c0_150, %c0_151, %c15_152] : memref<4x8x225xf32, #tpu.memory_space<vmem>>, vector<1x8x209xf32>
    %285 = vector.shape_cast %284 : vector<1x8x209xf32> to vector<8x209xf32>
    %c42 = arith.constant 42 : index
    %286 = memref.load %arg1[%c42] : memref<90xf32, #tpu.memory_space<smem>>
    %287 = vector.broadcast %286 : f32 to vector<8x209xf32>
    %288 = arith.mulf %285, %287 : vector<8x209xf32>
    %289 = arith.addf %283, %288 : vector<8x209xf32>
    %c1_153 = arith.constant 1 : index
    %c0_154 = arith.constant 0 : index
    %c15_155 = arith.constant 15 : index
    %290 = vector.load %arg3[%c1_153, %c0_154, %c15_155] : memref<4x8x225xf32, #tpu.memory_space<vmem>>, vector<1x8x209xf32>
    %291 = vector.shape_cast %290 : vector<1x8x209xf32> to vector<8x209xf32>
    %c43 = arith.constant 43 : index
    %292 = memref.load %arg1[%c43] : memref<90xf32, #tpu.memory_space<smem>>
    %293 = vector.broadcast %292 : f32 to vector<8x209xf32>
    %294 = arith.mulf %291, %293 : vector<8x209xf32>
    %295 = arith.addf %289, %294 : vector<8x209xf32>
    %c0_156 = arith.constant 0 : index
    %c0_157 = arith.constant 0 : index
    %c16_158 = arith.constant 16 : index
    %296 = vector.load %arg3[%c0_156, %c0_157, %c16_158] : memref<4x8x225xf32, #tpu.memory_space<vmem>>, vector<1x8x209xf32>
    %297 = vector.shape_cast %296 : vector<1x8x209xf32> to vector<8x209xf32>
    %c44 = arith.constant 44 : index
    %298 = memref.load %arg1[%c44] : memref<90xf32, #tpu.memory_space<smem>>
    %299 = vector.broadcast %298 : f32 to vector<8x209xf32>
    %300 = arith.mulf %297, %299 : vector<8x209xf32>
    %301 = arith.addf %295, %300 : vector<8x209xf32>
    %c4_159 = arith.constant 4 : index
    %302 = memref.load %arg2[%c4_159] : memref<10xf32, #tpu.memory_space<smem>>
    %303 = vector.broadcast %302 : f32 to vector<8x209xf32>
    %304 = arith.addf %301, %303 : vector<8x209xf32>
    %cst_160 = arith.constant 0.000000e+00 : f32
    %305 = vector.broadcast %cst_160 : f32 to vector<8x209xf32>
    %306 = arith.maximumf %304, %305 : vector<8x209xf32>
    %c4_161 = arith.constant 4 : index
    %c0_162 = arith.constant 0 : index
    %c0_163 = arith.constant 0 : index
    %307 = vector.load %arg4[%c4_161, %c0_162, %c0_163] : memref<10x10x209xf32, #tpu.memory_space<vmem>>, vector<1x10x209xf32>
    %308 = vector.shape_cast %307 : vector<1x10x209xf32> to vector<10x209xf32>
    %cst_164 = arith.constant dense<0.000000e+00> : vector<8x10xf32>
    %309 = tpu.matmul %306, %308, %cst_164 {dimension_numbers = #tpu.dot_dimension_numbers<[1], [1], [0], [0], [0, 0, 1, 0], [], []>} : vector<8x209xf32>, vector<10x209xf32>, vector<8x10xf32> -> vector<8x10xf32>
    %310 = arith.addf %248, %309 : vector<8x10xf32>
    %c0_165 = arith.constant 0 : index
    %c0_166 = arith.constant 0 : index
    %c0_167 = arith.constant 0 : index
    %311 = vector.load %arg3[%c0_165, %c0_166, %c0_167] : memref<4x8x225xf32, #tpu.memory_space<vmem>>, vector<1x8x209xf32>
    %312 = vector.shape_cast %311 : vector<1x8x209xf32> to vector<8x209xf32>
    %c45 = arith.constant 45 : index
    %313 = memref.load %arg1[%c45] : memref<90xf32, #tpu.memory_space<smem>>
    %314 = vector.broadcast %313 : f32 to vector<8x209xf32>
    %315 = arith.mulf %312, %314 : vector<8x209xf32>
    %c1_168 = arith.constant 1 : index
    %c0_169 = arith.constant 0 : index
    %c0_170 = arith.constant 0 : index
    %316 = vector.load %arg3[%c1_168, %c0_169, %c0_170] : memref<4x8x225xf32, #tpu.memory_space<vmem>>, vector<1x8x209xf32>
    %317 = vector.shape_cast %316 : vector<1x8x209xf32> to vector<8x209xf32>
    %c46 = arith.constant 46 : index
    %318 = memref.load %arg1[%c46] : memref<90xf32, #tpu.memory_space<smem>>
    %319 = vector.broadcast %318 : f32 to vector<8x209xf32>
    %320 = arith.mulf %317, %319 : vector<8x209xf32>
    %321 = arith.addf %315, %320 : vector<8x209xf32>
    %c0_171 = arith.constant 0 : index
    %c0_172 = arith.constant 0 : index
    %c1_173 = arith.constant 1 : index
    %322 = vector.load %arg3[%c0_171, %c0_172, %c1_173] : memref<4x8x225xf32, #tpu.memory_space<vmem>>, vector<1x8x209xf32>
    %323 = vector.shape_cast %322 : vector<1x8x209xf32> to vector<8x209xf32>
    %c47 = arith.constant 47 : index
    %324 = memref.load %arg1[%c47] : memref<90xf32, #tpu.memory_space<smem>>
    %325 = vector.broadcast %324 : f32 to vector<8x209xf32>
    %326 = arith.mulf %323, %325 : vector<8x209xf32>
    %327 = arith.addf %321, %326 : vector<8x209xf32>
    %c2_174 = arith.constant 2 : index
    %c0_175 = arith.constant 0 : index
    %c0_176 = arith.constant 0 : index
    %328 = vector.load %arg3[%c2_174, %c0_175, %c0_176] : memref<4x8x225xf32, #tpu.memory_space<vmem>>, vector<1x8x209xf32>
    %329 = vector.shape_cast %328 : vector<1x8x209xf32> to vector<8x209xf32>
    %c48 = arith.constant 48 : index
    %330 = memref.load %arg1[%c48] : memref<90xf32, #tpu.memory_space<smem>>
    %331 = vector.broadcast %330 : f32 to vector<8x209xf32>
    %332 = arith.mulf %329, %331 : vector<8x209xf32>
    %333 = arith.addf %327, %332 : vector<8x209xf32>
    %c3_177 = arith.constant 3 : index
    %c0_178 = arith.constant 0 : index
    %c0_179 = arith.constant 0 : index
    %334 = vector.load %arg3[%c3_177, %c0_178, %c0_179] : memref<4x8x225xf32, #tpu.memory_space<vmem>>, vector<1x8x209xf32>
    %335 = vector.shape_cast %334 : vector<1x8x209xf32> to vector<8x209xf32>
    %c49 = arith.constant 49 : index
    %336 = memref.load %arg1[%c49] : memref<90xf32, #tpu.memory_space<smem>>
    %337 = vector.broadcast %336 : f32 to vector<8x209xf32>
    %338 = arith.mulf %335, %337 : vector<8x209xf32>
    %339 = arith.addf %333, %338 : vector<8x209xf32>
    %c2_180 = arith.constant 2 : index
    %c0_181 = arith.constant 0 : index
    %c1_182 = arith.constant 1 : index
    %340 = vector.load %arg3[%c2_180, %c0_181, %c1_182] : memref<4x8x225xf32, #tpu.memory_space<vmem>>, vector<1x8x209xf32>
    %341 = vector.shape_cast %340 : vector<1x8x209xf32> to vector<8x209xf32>
    %c50 = arith.constant 50 : index
    %342 = memref.load %arg1[%c50] : memref<90xf32, #tpu.memory_space<smem>>
    %343 = vector.broadcast %342 : f32 to vector<8x209xf32>
    %344 = arith.mulf %341, %343 : vector<8x209xf32>
    %345 = arith.addf %339, %344 : vector<8x209xf32>
    %c0_183 = arith.constant 0 : index
    %c0_184 = arith.constant 0 : index
    %c15_185 = arith.constant 15 : index
    %346 = vector.load %arg3[%c0_183, %c0_184, %c15_185] : memref<4x8x225xf32, #tpu.memory_space<vmem>>, vector<1x8x209xf32>
    %347 = vector.shape_cast %346 : vector<1x8x209xf32> to vector<8x209xf32>
    %c51 = arith.constant 51 : index
    %348 = memref.load %arg1[%c51] : memref<90xf32, #tpu.memory_space<smem>>
    %349 = vector.broadcast %348 : f32 to vector<8x209xf32>
    %350 = arith.mulf %347, %349 : vector<8x209xf32>
    %351 = arith.addf %345, %350 : vector<8x209xf32>
    %c1_186 = arith.constant 1 : index
    %c0_187 = arith.constant 0 : index
    %c15_188 = arith.constant 15 : index
    %352 = vector.load %arg3[%c1_186, %c0_187, %c15_188] : memref<4x8x225xf32, #tpu.memory_space<vmem>>, vector<1x8x209xf32>
    %353 = vector.shape_cast %352 : vector<1x8x209xf32> to vector<8x209xf32>
    %c52 = arith.constant 52 : index
    %354 = memref.load %arg1[%c52] : memref<90xf32, #tpu.memory_space<smem>>
    %355 = vector.broadcast %354 : f32 to vector<8x209xf32>
    %356 = arith.mulf %353, %355 : vector<8x209xf32>
    %357 = arith.addf %351, %356 : vector<8x209xf32>
    %c0_189 = arith.constant 0 : index
    %c0_190 = arith.constant 0 : index
    %c16_191 = arith.constant 16 : index
    %358 = vector.load %arg3[%c0_189, %c0_190, %c16_191] : memref<4x8x225xf32, #tpu.memory_space<vmem>>, vector<1x8x209xf32>
    %359 = vector.shape_cast %358 : vector<1x8x209xf32> to vector<8x209xf32>
    %c53 = arith.constant 53 : index
    %360 = memref.load %arg1[%c53] : memref<90xf32, #tpu.memory_space<smem>>
    %361 = vector.broadcast %360 : f32 to vector<8x209xf32>
    %362 = arith.mulf %359, %361 : vector<8x209xf32>
    %363 = arith.addf %357, %362 : vector<8x209xf32>
    %c5_192 = arith.constant 5 : index
    %364 = memref.load %arg2[%c5_192] : memref<10xf32, #tpu.memory_space<smem>>
    %365 = vector.broadcast %364 : f32 to vector<8x209xf32>
    %366 = arith.addf %363, %365 : vector<8x209xf32>
    %cst_193 = arith.constant 0.000000e+00 : f32
    %367 = vector.broadcast %cst_193 : f32 to vector<8x209xf32>
    %368 = arith.maximumf %366, %367 : vector<8x209xf32>
    %c5_194 = arith.constant 5 : index
    %c0_195 = arith.constant 0 : index
    %c0_196 = arith.constant 0 : index
    %369 = vector.load %arg4[%c5_194, %c0_195, %c0_196] : memref<10x10x209xf32, #tpu.memory_space<vmem>>, vector<1x10x209xf32>
    %370 = vector.shape_cast %369 : vector<1x10x209xf32> to vector<10x209xf32>
    %cst_197 = arith.constant dense<0.000000e+00> : vector<8x10xf32>
    %371 = tpu.matmul %368, %370, %cst_197 {dimension_numbers = #tpu.dot_dimension_numbers<[1], [1], [0], [0], [0, 0, 1, 0], [], []>} : vector<8x209xf32>, vector<10x209xf32>, vector<8x10xf32> -> vector<8x10xf32>
    %372 = arith.addf %310, %371 : vector<8x10xf32>
    %c0_198 = arith.constant 0 : index
    %c0_199 = arith.constant 0 : index
    %c0_200 = arith.constant 0 : index
    %373 = vector.load %arg3[%c0_198, %c0_199, %c0_200] : memref<4x8x225xf32, #tpu.memory_space<vmem>>, vector<1x8x209xf32>
    %374 = vector.shape_cast %373 : vector<1x8x209xf32> to vector<8x209xf32>
    %c54 = arith.constant 54 : index
    %375 = memref.load %arg1[%c54] : memref<90xf32, #tpu.memory_space<smem>>
    %376 = vector.broadcast %375 : f32 to vector<8x209xf32>
    %377 = arith.mulf %374, %376 : vector<8x209xf32>
    %c1_201 = arith.constant 1 : index
    %c0_202 = arith.constant 0 : index
    %c0_203 = arith.constant 0 : index
    %378 = vector.load %arg3[%c1_201, %c0_202, %c0_203] : memref<4x8x225xf32, #tpu.memory_space<vmem>>, vector<1x8x209xf32>
    %379 = vector.shape_cast %378 : vector<1x8x209xf32> to vector<8x209xf32>
    %c55 = arith.constant 55 : index
    %380 = memref.load %arg1[%c55] : memref<90xf32, #tpu.memory_space<smem>>
    %381 = vector.broadcast %380 : f32 to vector<8x209xf32>
    %382 = arith.mulf %379, %381 : vector<8x209xf32>
    %383 = arith.addf %377, %382 : vector<8x209xf32>
    %c0_204 = arith.constant 0 : index
    %c0_205 = arith.constant 0 : index
    %c1_206 = arith.constant 1 : index
    %384 = vector.load %arg3[%c0_204, %c0_205, %c1_206] : memref<4x8x225xf32, #tpu.memory_space<vmem>>, vector<1x8x209xf32>
    %385 = vector.shape_cast %384 : vector<1x8x209xf32> to vector<8x209xf32>
    %c56 = arith.constant 56 : index
    %386 = memref.load %arg1[%c56] : memref<90xf32, #tpu.memory_space<smem>>
    %387 = vector.broadcast %386 : f32 to vector<8x209xf32>
    %388 = arith.mulf %385, %387 : vector<8x209xf32>
    %389 = arith.addf %383, %388 : vector<8x209xf32>
    %c2_207 = arith.constant 2 : index
    %c0_208 = arith.constant 0 : index
    %c0_209 = arith.constant 0 : index
    %390 = vector.load %arg3[%c2_207, %c0_208, %c0_209] : memref<4x8x225xf32, #tpu.memory_space<vmem>>, vector<1x8x209xf32>
    %391 = vector.shape_cast %390 : vector<1x8x209xf32> to vector<8x209xf32>
    %c57 = arith.constant 57 : index
    %392 = memref.load %arg1[%c57] : memref<90xf32, #tpu.memory_space<smem>>
    %393 = vector.broadcast %392 : f32 to vector<8x209xf32>
    %394 = arith.mulf %391, %393 : vector<8x209xf32>
    %395 = arith.addf %389, %394 : vector<8x209xf32>
    %c3_210 = arith.constant 3 : index
    %c0_211 = arith.constant 0 : index
    %c0_212 = arith.constant 0 : index
    %396 = vector.load %arg3[%c3_210, %c0_211, %c0_212] : memref<4x8x225xf32, #tpu.memory_space<vmem>>, vector<1x8x209xf32>
    %397 = vector.shape_cast %396 : vector<1x8x209xf32> to vector<8x209xf32>
    %c58 = arith.constant 58 : index
    %398 = memref.load %arg1[%c58] : memref<90xf32, #tpu.memory_space<smem>>
    %399 = vector.broadcast %398 : f32 to vector<8x209xf32>
    %400 = arith.mulf %397, %399 : vector<8x209xf32>
    %401 = arith.addf %395, %400 : vector<8x209xf32>
    %c2_213 = arith.constant 2 : index
    %c0_214 = arith.constant 0 : index
    %c1_215 = arith.constant 1 : index
    %402 = vector.load %arg3[%c2_213, %c0_214, %c1_215] : memref<4x8x225xf32, #tpu.memory_space<vmem>>, vector<1x8x209xf32>
    %403 = vector.shape_cast %402 : vector<1x8x209xf32> to vector<8x209xf32>
    %c59 = arith.constant 59 : index
    %404 = memref.load %arg1[%c59] : memref<90xf32, #tpu.memory_space<smem>>
    %405 = vector.broadcast %404 : f32 to vector<8x209xf32>
    %406 = arith.mulf %403, %405 : vector<8x209xf32>
    %407 = arith.addf %401, %406 : vector<8x209xf32>
    %c0_216 = arith.constant 0 : index
    %c0_217 = arith.constant 0 : index
    %c15_218 = arith.constant 15 : index
    %408 = vector.load %arg3[%c0_216, %c0_217, %c15_218] : memref<4x8x225xf32, #tpu.memory_space<vmem>>, vector<1x8x209xf32>
    %409 = vector.shape_cast %408 : vector<1x8x209xf32> to vector<8x209xf32>
    %c60 = arith.constant 60 : index
    %410 = memref.load %arg1[%c60] : memref<90xf32, #tpu.memory_space<smem>>
    %411 = vector.broadcast %410 : f32 to vector<8x209xf32>
    %412 = arith.mulf %409, %411 : vector<8x209xf32>
    %413 = arith.addf %407, %412 : vector<8x209xf32>
    %c1_219 = arith.constant 1 : index
    %c0_220 = arith.constant 0 : index
    %c15_221 = arith.constant 15 : index
    %414 = vector.load %arg3[%c1_219, %c0_220, %c15_221] : memref<4x8x225xf32, #tpu.memory_space<vmem>>, vector<1x8x209xf32>
    %415 = vector.shape_cast %414 : vector<1x8x209xf32> to vector<8x209xf32>
    %c61 = arith.constant 61 : index
    %416 = memref.load %arg1[%c61] : memref<90xf32, #tpu.memory_space<smem>>
    %417 = vector.broadcast %416 : f32 to vector<8x209xf32>
    %418 = arith.mulf %415, %417 : vector<8x209xf32>
    %419 = arith.addf %413, %418 : vector<8x209xf32>
    %c0_222 = arith.constant 0 : index
    %c0_223 = arith.constant 0 : index
    %c16_224 = arith.constant 16 : index
    %420 = vector.load %arg3[%c0_222, %c0_223, %c16_224] : memref<4x8x225xf32, #tpu.memory_space<vmem>>, vector<1x8x209xf32>
    %421 = vector.shape_cast %420 : vector<1x8x209xf32> to vector<8x209xf32>
    %c62 = arith.constant 62 : index
    %422 = memref.load %arg1[%c62] : memref<90xf32, #tpu.memory_space<smem>>
    %423 = vector.broadcast %422 : f32 to vector<8x209xf32>
    %424 = arith.mulf %421, %423 : vector<8x209xf32>
    %425 = arith.addf %419, %424 : vector<8x209xf32>
    %c6_225 = arith.constant 6 : index
    %426 = memref.load %arg2[%c6_225] : memref<10xf32, #tpu.memory_space<smem>>
    %427 = vector.broadcast %426 : f32 to vector<8x209xf32>
    %428 = arith.addf %425, %427 : vector<8x209xf32>
    %cst_226 = arith.constant 0.000000e+00 : f32
    %429 = vector.broadcast %cst_226 : f32 to vector<8x209xf32>
    %430 = arith.maximumf %428, %429 : vector<8x209xf32>
    %c6_227 = arith.constant 6 : index
    %c0_228 = arith.constant 0 : index
    %c0_229 = arith.constant 0 : index
    %431 = vector.load %arg4[%c6_227, %c0_228, %c0_229] : memref<10x10x209xf32, #tpu.memory_space<vmem>>, vector<1x10x209xf32>
    %432 = vector.shape_cast %431 : vector<1x10x209xf32> to vector<10x209xf32>
    %cst_230 = arith.constant dense<0.000000e+00> : vector<8x10xf32>
    %433 = tpu.matmul %430, %432, %cst_230 {dimension_numbers = #tpu.dot_dimension_numbers<[1], [1], [0], [0], [0, 0, 1, 0], [], []>} : vector<8x209xf32>, vector<10x209xf32>, vector<8x10xf32> -> vector<8x10xf32>
    %434 = arith.addf %372, %433 : vector<8x10xf32>
    %c0_231 = arith.constant 0 : index
    %c0_232 = arith.constant 0 : index
    %c0_233 = arith.constant 0 : index
    %435 = vector.load %arg3[%c0_231, %c0_232, %c0_233] : memref<4x8x225xf32, #tpu.memory_space<vmem>>, vector<1x8x209xf32>
    %436 = vector.shape_cast %435 : vector<1x8x209xf32> to vector<8x209xf32>
    %c63 = arith.constant 63 : index
    %437 = memref.load %arg1[%c63] : memref<90xf32, #tpu.memory_space<smem>>
    %438 = vector.broadcast %437 : f32 to vector<8x209xf32>
    %439 = arith.mulf %436, %438 : vector<8x209xf32>
    %c1_234 = arith.constant 1 : index
    %c0_235 = arith.constant 0 : index
    %c0_236 = arith.constant 0 : index
    %440 = vector.load %arg3[%c1_234, %c0_235, %c0_236] : memref<4x8x225xf32, #tpu.memory_space<vmem>>, vector<1x8x209xf32>
    %441 = vector.shape_cast %440 : vector<1x8x209xf32> to vector<8x209xf32>
    %c64 = arith.constant 64 : index
    %442 = memref.load %arg1[%c64] : memref<90xf32, #tpu.memory_space<smem>>
    %443 = vector.broadcast %442 : f32 to vector<8x209xf32>
    %444 = arith.mulf %441, %443 : vector<8x209xf32>
    %445 = arith.addf %439, %444 : vector<8x209xf32>
    %c0_237 = arith.constant 0 : index
    %c0_238 = arith.constant 0 : index
    %c1_239 = arith.constant 1 : index
    %446 = vector.load %arg3[%c0_237, %c0_238, %c1_239] : memref<4x8x225xf32, #tpu.memory_space<vmem>>, vector<1x8x209xf32>
    %447 = vector.shape_cast %446 : vector<1x8x209xf32> to vector<8x209xf32>
    %c65 = arith.constant 65 : index
    %448 = memref.load %arg1[%c65] : memref<90xf32, #tpu.memory_space<smem>>
    %449 = vector.broadcast %448 : f32 to vector<8x209xf32>
    %450 = arith.mulf %447, %449 : vector<8x209xf32>
    %451 = arith.addf %445, %450 : vector<8x209xf32>
    %c2_240 = arith.constant 2 : index
    %c0_241 = arith.constant 0 : index
    %c0_242 = arith.constant 0 : index
    %452 = vector.load %arg3[%c2_240, %c0_241, %c0_242] : memref<4x8x225xf32, #tpu.memory_space<vmem>>, vector<1x8x209xf32>
    %453 = vector.shape_cast %452 : vector<1x8x209xf32> to vector<8x209xf32>
    %c66 = arith.constant 66 : index
    %454 = memref.load %arg1[%c66] : memref<90xf32, #tpu.memory_space<smem>>
    %455 = vector.broadcast %454 : f32 to vector<8x209xf32>
    %456 = arith.mulf %453, %455 : vector<8x209xf32>
    %457 = arith.addf %451, %456 : vector<8x209xf32>
    %c3_243 = arith.constant 3 : index
    %c0_244 = arith.constant 0 : index
    %c0_245 = arith.constant 0 : index
    %458 = vector.load %arg3[%c3_243, %c0_244, %c0_245] : memref<4x8x225xf32, #tpu.memory_space<vmem>>, vector<1x8x209xf32>
    %459 = vector.shape_cast %458 : vector<1x8x209xf32> to vector<8x209xf32>
    %c67 = arith.constant 67 : index
    %460 = memref.load %arg1[%c67] : memref<90xf32, #tpu.memory_space<smem>>
    %461 = vector.broadcast %460 : f32 to vector<8x209xf32>
    %462 = arith.mulf %459, %461 : vector<8x209xf32>
    %463 = arith.addf %457, %462 : vector<8x209xf32>
    %c2_246 = arith.constant 2 : index
    %c0_247 = arith.constant 0 : index
    %c1_248 = arith.constant 1 : index
    %464 = vector.load %arg3[%c2_246, %c0_247, %c1_248] : memref<4x8x225xf32, #tpu.memory_space<vmem>>, vector<1x8x209xf32>
    %465 = vector.shape_cast %464 : vector<1x8x209xf32> to vector<8x209xf32>
    %c68 = arith.constant 68 : index
    %466 = memref.load %arg1[%c68] : memref<90xf32, #tpu.memory_space<smem>>
    %467 = vector.broadcast %466 : f32 to vector<8x209xf32>
    %468 = arith.mulf %465, %467 : vector<8x209xf32>
    %469 = arith.addf %463, %468 : vector<8x209xf32>
    %c0_249 = arith.constant 0 : index
    %c0_250 = arith.constant 0 : index
    %c15_251 = arith.constant 15 : index
    %470 = vector.load %arg3[%c0_249, %c0_250, %c15_251] : memref<4x8x225xf32, #tpu.memory_space<vmem>>, vector<1x8x209xf32>
    %471 = vector.shape_cast %470 : vector<1x8x209xf32> to vector<8x209xf32>
    %c69 = arith.constant 69 : index
    %472 = memref.load %arg1[%c69] : memref<90xf32, #tpu.memory_space<smem>>
    %473 = vector.broadcast %472 : f32 to vector<8x209xf32>
    %474 = arith.mulf %471, %473 : vector<8x209xf32>
    %475 = arith.addf %469, %474 : vector<8x209xf32>
    %c1_252 = arith.constant 1 : index
    %c0_253 = arith.constant 0 : index
    %c15_254 = arith.constant 15 : index
    %476 = vector.load %arg3[%c1_252, %c0_253, %c15_254] : memref<4x8x225xf32, #tpu.memory_space<vmem>>, vector<1x8x209xf32>
    %477 = vector.shape_cast %476 : vector<1x8x209xf32> to vector<8x209xf32>
    %c70 = arith.constant 70 : index
    %478 = memref.load %arg1[%c70] : memref<90xf32, #tpu.memory_space<smem>>
    %479 = vector.broadcast %478 : f32 to vector<8x209xf32>
    %480 = arith.mulf %477, %479 : vector<8x209xf32>
    %481 = arith.addf %475, %480 : vector<8x209xf32>
    %c0_255 = arith.constant 0 : index
    %c0_256 = arith.constant 0 : index
    %c16_257 = arith.constant 16 : index
    %482 = vector.load %arg3[%c0_255, %c0_256, %c16_257] : memref<4x8x225xf32, #tpu.memory_space<vmem>>, vector<1x8x209xf32>
    %483 = vector.shape_cast %482 : vector<1x8x209xf32> to vector<8x209xf32>
    %c71 = arith.constant 71 : index
    %484 = memref.load %arg1[%c71] : memref<90xf32, #tpu.memory_space<smem>>
    %485 = vector.broadcast %484 : f32 to vector<8x209xf32>
    %486 = arith.mulf %483, %485 : vector<8x209xf32>
    %487 = arith.addf %481, %486 : vector<8x209xf32>
    %c7_258 = arith.constant 7 : index
    %488 = memref.load %arg2[%c7_258] : memref<10xf32, #tpu.memory_space<smem>>
    %489 = vector.broadcast %488 : f32 to vector<8x209xf32>
    %490 = arith.addf %487, %489 : vector<8x209xf32>
    %cst_259 = arith.constant 0.000000e+00 : f32
    %491 = vector.broadcast %cst_259 : f32 to vector<8x209xf32>
    %492 = arith.maximumf %490, %491 : vector<8x209xf32>
    %c7_260 = arith.constant 7 : index
    %c0_261 = arith.constant 0 : index
    %c0_262 = arith.constant 0 : index
    %493 = vector.load %arg4[%c7_260, %c0_261, %c0_262] : memref<10x10x209xf32, #tpu.memory_space<vmem>>, vector<1x10x209xf32>
    %494 = vector.shape_cast %493 : vector<1x10x209xf32> to vector<10x209xf32>
    %cst_263 = arith.constant dense<0.000000e+00> : vector<8x10xf32>
    %495 = tpu.matmul %492, %494, %cst_263 {dimension_numbers = #tpu.dot_dimension_numbers<[1], [1], [0], [0], [0, 0, 1, 0], [], []>} : vector<8x209xf32>, vector<10x209xf32>, vector<8x10xf32> -> vector<8x10xf32>
    %496 = arith.addf %434, %495 : vector<8x10xf32>
    %c0_264 = arith.constant 0 : index
    %c0_265 = arith.constant 0 : index
    %c0_266 = arith.constant 0 : index
    %497 = vector.load %arg3[%c0_264, %c0_265, %c0_266] : memref<4x8x225xf32, #tpu.memory_space<vmem>>, vector<1x8x209xf32>
    %498 = vector.shape_cast %497 : vector<1x8x209xf32> to vector<8x209xf32>
    %c72 = arith.constant 72 : index
    %499 = memref.load %arg1[%c72] : memref<90xf32, #tpu.memory_space<smem>>
    %500 = vector.broadcast %499 : f32 to vector<8x209xf32>
    %501 = arith.mulf %498, %500 : vector<8x209xf32>
    %c1_267 = arith.constant 1 : index
    %c0_268 = arith.constant 0 : index
    %c0_269 = arith.constant 0 : index
    %502 = vector.load %arg3[%c1_267, %c0_268, %c0_269] : memref<4x8x225xf32, #tpu.memory_space<vmem>>, vector<1x8x209xf32>
    %503 = vector.shape_cast %502 : vector<1x8x209xf32> to vector<8x209xf32>
    %c73 = arith.constant 73 : index
    %504 = memref.load %arg1[%c73] : memref<90xf32, #tpu.memory_space<smem>>
    %505 = vector.broadcast %504 : f32 to vector<8x209xf32>
    %506 = arith.mulf %503, %505 : vector<8x209xf32>
    %507 = arith.addf %501, %506 : vector<8x209xf32>
    %c0_270 = arith.constant 0 : index
    %c0_271 = arith.constant 0 : index
    %c1_272 = arith.constant 1 : index
    %508 = vector.load %arg3[%c0_270, %c0_271, %c1_272] : memref<4x8x225xf32, #tpu.memory_space<vmem>>, vector<1x8x209xf32>
    %509 = vector.shape_cast %508 : vector<1x8x209xf32> to vector<8x209xf32>
    %c74 = arith.constant 74 : index
    %510 = memref.load %arg1[%c74] : memref<90xf32, #tpu.memory_space<smem>>
    %511 = vector.broadcast %510 : f32 to vector<8x209xf32>
    %512 = arith.mulf %509, %511 : vector<8x209xf32>
    %513 = arith.addf %507, %512 : vector<8x209xf32>
    %c2_273 = arith.constant 2 : index
    %c0_274 = arith.constant 0 : index
    %c0_275 = arith.constant 0 : index
    %514 = vector.load %arg3[%c2_273, %c0_274, %c0_275] : memref<4x8x225xf32, #tpu.memory_space<vmem>>, vector<1x8x209xf32>
    %515 = vector.shape_cast %514 : vector<1x8x209xf32> to vector<8x209xf32>
    %c75 = arith.constant 75 : index
    %516 = memref.load %arg1[%c75] : memref<90xf32, #tpu.memory_space<smem>>
    %517 = vector.broadcast %516 : f32 to vector<8x209xf32>
    %518 = arith.mulf %515, %517 : vector<8x209xf32>
    %519 = arith.addf %513, %518 : vector<8x209xf32>
    %c3_276 = arith.constant 3 : index
    %c0_277 = arith.constant 0 : index
    %c0_278 = arith.constant 0 : index
    %520 = vector.load %arg3[%c3_276, %c0_277, %c0_278] : memref<4x8x225xf32, #tpu.memory_space<vmem>>, vector<1x8x209xf32>
    %521 = vector.shape_cast %520 : vector<1x8x209xf32> to vector<8x209xf32>
    %c76 = arith.constant 76 : index
    %522 = memref.load %arg1[%c76] : memref<90xf32, #tpu.memory_space<smem>>
    %523 = vector.broadcast %522 : f32 to vector<8x209xf32>
    %524 = arith.mulf %521, %523 : vector<8x209xf32>
    %525 = arith.addf %519, %524 : vector<8x209xf32>
    %c2_279 = arith.constant 2 : index
    %c0_280 = arith.constant 0 : index
    %c1_281 = arith.constant 1 : index
    %526 = vector.load %arg3[%c2_279, %c0_280, %c1_281] : memref<4x8x225xf32, #tpu.memory_space<vmem>>, vector<1x8x209xf32>
    %527 = vector.shape_cast %526 : vector<1x8x209xf32> to vector<8x209xf32>
    %c77 = arith.constant 77 : index
    %528 = memref.load %arg1[%c77] : memref<90xf32, #tpu.memory_space<smem>>
    %529 = vector.broadcast %528 : f32 to vector<8x209xf32>
    %530 = arith.mulf %527, %529 : vector<8x209xf32>
    %531 = arith.addf %525, %530 : vector<8x209xf32>
    %c0_282 = arith.constant 0 : index
    %c0_283 = arith.constant 0 : index
    %c15_284 = arith.constant 15 : index
    %532 = vector.load %arg3[%c0_282, %c0_283, %c15_284] : memref<4x8x225xf32, #tpu.memory_space<vmem>>, vector<1x8x209xf32>
    %533 = vector.shape_cast %532 : vector<1x8x209xf32> to vector<8x209xf32>
    %c78 = arith.constant 78 : index
    %534 = memref.load %arg1[%c78] : memref<90xf32, #tpu.memory_space<smem>>
    %535 = vector.broadcast %534 : f32 to vector<8x209xf32>
    %536 = arith.mulf %533, %535 : vector<8x209xf32>
    %537 = arith.addf %531, %536 : vector<8x209xf32>
    %c1_285 = arith.constant 1 : index
    %c0_286 = arith.constant 0 : index
    %c15_287 = arith.constant 15 : index
    %538 = vector.load %arg3[%c1_285, %c0_286, %c15_287] : memref<4x8x225xf32, #tpu.memory_space<vmem>>, vector<1x8x209xf32>
    %539 = vector.shape_cast %538 : vector<1x8x209xf32> to vector<8x209xf32>
    %c79 = arith.constant 79 : index
    %540 = memref.load %arg1[%c79] : memref<90xf32, #tpu.memory_space<smem>>
    %541 = vector.broadcast %540 : f32 to vector<8x209xf32>
    %542 = arith.mulf %539, %541 : vector<8x209xf32>
    %543 = arith.addf %537, %542 : vector<8x209xf32>
    %c0_288 = arith.constant 0 : index
    %c0_289 = arith.constant 0 : index
    %c16_290 = arith.constant 16 : index
    %544 = vector.load %arg3[%c0_288, %c0_289, %c16_290] : memref<4x8x225xf32, #tpu.memory_space<vmem>>, vector<1x8x209xf32>
    %545 = vector.shape_cast %544 : vector<1x8x209xf32> to vector<8x209xf32>
    %c80 = arith.constant 80 : index
    %546 = memref.load %arg1[%c80] : memref<90xf32, #tpu.memory_space<smem>>
    %547 = vector.broadcast %546 : f32 to vector<8x209xf32>
    %548 = arith.mulf %545, %547 : vector<8x209xf32>
    %549 = arith.addf %543, %548 : vector<8x209xf32>
    %c8_291 = arith.constant 8 : index
    %550 = memref.load %arg2[%c8_291] : memref<10xf32, #tpu.memory_space<smem>>
    %551 = vector.broadcast %550 : f32 to vector<8x209xf32>
    %552 = arith.addf %549, %551 : vector<8x209xf32>
    %cst_292 = arith.constant 0.000000e+00 : f32
    %553 = vector.broadcast %cst_292 : f32 to vector<8x209xf32>
    %554 = arith.maximumf %552, %553 : vector<8x209xf32>
    %c8_293 = arith.constant 8 : index
    %c0_294 = arith.constant 0 : index
    %c0_295 = arith.constant 0 : index
    %555 = vector.load %arg4[%c8_293, %c0_294, %c0_295] : memref<10x10x209xf32, #tpu.memory_space<vmem>>, vector<1x10x209xf32>
    %556 = vector.shape_cast %555 : vector<1x10x209xf32> to vector<10x209xf32>
    %cst_296 = arith.constant dense<0.000000e+00> : vector<8x10xf32>
    %557 = tpu.matmul %554, %556, %cst_296 {dimension_numbers = #tpu.dot_dimension_numbers<[1], [1], [0], [0], [0, 0, 1, 0], [], []>} : vector<8x209xf32>, vector<10x209xf32>, vector<8x10xf32> -> vector<8x10xf32>
    %558 = arith.addf %496, %557 : vector<8x10xf32>
    %c0_297 = arith.constant 0 : index
    %c0_298 = arith.constant 0 : index
    %c0_299 = arith.constant 0 : index
    %559 = vector.load %arg3[%c0_297, %c0_298, %c0_299] : memref<4x8x225xf32, #tpu.memory_space<vmem>>, vector<1x8x209xf32>
    %560 = vector.shape_cast %559 : vector<1x8x209xf32> to vector<8x209xf32>
    %c81 = arith.constant 81 : index
    %561 = memref.load %arg1[%c81] : memref<90xf32, #tpu.memory_space<smem>>
    %562 = vector.broadcast %561 : f32 to vector<8x209xf32>
    %563 = arith.mulf %560, %562 : vector<8x209xf32>
    %c1_300 = arith.constant 1 : index
    %c0_301 = arith.constant 0 : index
    %c0_302 = arith.constant 0 : index
    %564 = vector.load %arg3[%c1_300, %c0_301, %c0_302] : memref<4x8x225xf32, #tpu.memory_space<vmem>>, vector<1x8x209xf32>
    %565 = vector.shape_cast %564 : vector<1x8x209xf32> to vector<8x209xf32>
    %c82 = arith.constant 82 : index
    %566 = memref.load %arg1[%c82] : memref<90xf32, #tpu.memory_space<smem>>
    %567 = vector.broadcast %566 : f32 to vector<8x209xf32>
    %568 = arith.mulf %565, %567 : vector<8x209xf32>
    %569 = arith.addf %563, %568 : vector<8x209xf32>
    %c0_303 = arith.constant 0 : index
    %c0_304 = arith.constant 0 : index
    %c1_305 = arith.constant 1 : index
    %570 = vector.load %arg3[%c0_303, %c0_304, %c1_305] : memref<4x8x225xf32, #tpu.memory_space<vmem>>, vector<1x8x209xf32>
    %571 = vector.shape_cast %570 : vector<1x8x209xf32> to vector<8x209xf32>
    %c83 = arith.constant 83 : index
    %572 = memref.load %arg1[%c83] : memref<90xf32, #tpu.memory_space<smem>>
    %573 = vector.broadcast %572 : f32 to vector<8x209xf32>
    %574 = arith.mulf %571, %573 : vector<8x209xf32>
    %575 = arith.addf %569, %574 : vector<8x209xf32>
    %c2_306 = arith.constant 2 : index
    %c0_307 = arith.constant 0 : index
    %c0_308 = arith.constant 0 : index
    %576 = vector.load %arg3[%c2_306, %c0_307, %c0_308] : memref<4x8x225xf32, #tpu.memory_space<vmem>>, vector<1x8x209xf32>
    %577 = vector.shape_cast %576 : vector<1x8x209xf32> to vector<8x209xf32>
    %c84 = arith.constant 84 : index
    %578 = memref.load %arg1[%c84] : memref<90xf32, #tpu.memory_space<smem>>
    %579 = vector.broadcast %578 : f32 to vector<8x209xf32>
    %580 = arith.mulf %577, %579 : vector<8x209xf32>
    %581 = arith.addf %575, %580 : vector<8x209xf32>
    %c3_309 = arith.constant 3 : index
    %c0_310 = arith.constant 0 : index
    %c0_311 = arith.constant 0 : index
    %582 = vector.load %arg3[%c3_309, %c0_310, %c0_311] : memref<4x8x225xf32, #tpu.memory_space<vmem>>, vector<1x8x209xf32>
    %583 = vector.shape_cast %582 : vector<1x8x209xf32> to vector<8x209xf32>
    %c85 = arith.constant 85 : index
    %584 = memref.load %arg1[%c85] : memref<90xf32, #tpu.memory_space<smem>>
    %585 = vector.broadcast %584 : f32 to vector<8x209xf32>
    %586 = arith.mulf %583, %585 : vector<8x209xf32>
    %587 = arith.addf %581, %586 : vector<8x209xf32>
    %c2_312 = arith.constant 2 : index
    %c0_313 = arith.constant 0 : index
    %c1_314 = arith.constant 1 : index
    %588 = vector.load %arg3[%c2_312, %c0_313, %c1_314] : memref<4x8x225xf32, #tpu.memory_space<vmem>>, vector<1x8x209xf32>
    %589 = vector.shape_cast %588 : vector<1x8x209xf32> to vector<8x209xf32>
    %c86 = arith.constant 86 : index
    %590 = memref.load %arg1[%c86] : memref<90xf32, #tpu.memory_space<smem>>
    %591 = vector.broadcast %590 : f32 to vector<8x209xf32>
    %592 = arith.mulf %589, %591 : vector<8x209xf32>
    %593 = arith.addf %587, %592 : vector<8x209xf32>
    %c0_315 = arith.constant 0 : index
    %c0_316 = arith.constant 0 : index
    %c15_317 = arith.constant 15 : index
    %594 = vector.load %arg3[%c0_315, %c0_316, %c15_317] : memref<4x8x225xf32, #tpu.memory_space<vmem>>, vector<1x8x209xf32>
    %595 = vector.shape_cast %594 : vector<1x8x209xf32> to vector<8x209xf32>
    %c87 = arith.constant 87 : index
    %596 = memref.load %arg1[%c87] : memref<90xf32, #tpu.memory_space<smem>>
    %597 = vector.broadcast %596 : f32 to vector<8x209xf32>
    %598 = arith.mulf %595, %597 : vector<8x209xf32>
    %599 = arith.addf %593, %598 : vector<8x209xf32>
    %c1_318 = arith.constant 1 : index
    %c0_319 = arith.constant 0 : index
    %c15_320 = arith.constant 15 : index
    %600 = vector.load %arg3[%c1_318, %c0_319, %c15_320] : memref<4x8x225xf32, #tpu.memory_space<vmem>>, vector<1x8x209xf32>
    %601 = vector.shape_cast %600 : vector<1x8x209xf32> to vector<8x209xf32>
    %c88 = arith.constant 88 : index
    %602 = memref.load %arg1[%c88] : memref<90xf32, #tpu.memory_space<smem>>
    %603 = vector.broadcast %602 : f32 to vector<8x209xf32>
    %604 = arith.mulf %601, %603 : vector<8x209xf32>
    %605 = arith.addf %599, %604 : vector<8x209xf32>
    %c0_321 = arith.constant 0 : index
    %c0_322 = arith.constant 0 : index
    %c16_323 = arith.constant 16 : index
    %606 = vector.load %arg3[%c0_321, %c0_322, %c16_323] : memref<4x8x225xf32, #tpu.memory_space<vmem>>, vector<1x8x209xf32>
    %607 = vector.shape_cast %606 : vector<1x8x209xf32> to vector<8x209xf32>
    %c89 = arith.constant 89 : index
    %608 = memref.load %arg1[%c89] : memref<90xf32, #tpu.memory_space<smem>>
    %609 = vector.broadcast %608 : f32 to vector<8x209xf32>
    %610 = arith.mulf %607, %609 : vector<8x209xf32>
    %611 = arith.addf %605, %610 : vector<8x209xf32>
    %c9_324 = arith.constant 9 : index
    %612 = memref.load %arg2[%c9_324] : memref<10xf32, #tpu.memory_space<smem>>
    %613 = vector.broadcast %612 : f32 to vector<8x209xf32>
    %614 = arith.addf %611, %613 : vector<8x209xf32>
    %cst_325 = arith.constant 0.000000e+00 : f32
    %615 = vector.broadcast %cst_325 : f32 to vector<8x209xf32>
    %616 = arith.maximumf %614, %615 : vector<8x209xf32>
    %c9_326 = arith.constant 9 : index
    %c0_327 = arith.constant 0 : index
    %c0_328 = arith.constant 0 : index
    %617 = vector.load %arg4[%c9_326, %c0_327, %c0_328] : memref<10x10x209xf32, #tpu.memory_space<vmem>>, vector<1x10x209xf32>
    %618 = vector.shape_cast %617 : vector<1x10x209xf32> to vector<10x209xf32>
    %cst_329 = arith.constant dense<0.000000e+00> : vector<8x10xf32>
    %619 = tpu.matmul %616, %618, %cst_329 {dimension_numbers = #tpu.dot_dimension_numbers<[1], [1], [0], [0], [0, 0, 1, 0], [], []>} : vector<8x209xf32>, vector<10x209xf32>, vector<8x10xf32> -> vector<8x10xf32>
    %620 = arith.addf %558, %619 : vector<8x10xf32>
    %c0_330 = arith.constant 0 : index
    %c0_331 = arith.constant 0 : index
    %621 = vector.load %arg5[%c0_330, %c0_331] : memref<1x10xf32, #tpu.memory_space<vmem>>, vector<1x10xf32>
    %622 = vector.broadcast %621 : vector<1x10xf32> to vector<8x10xf32>
    %623 = arith.addf %620, %622 : vector<8x10xf32>
    %cst_332 = arith.constant dense<0xFF800000> : vector<8xf32>
    %624 = vector.multi_reduction <maximumf>, %623, %cst_332 [1] : vector<8x10xf32> to vector<8xf32>
    %625 = vector.shape_cast %624 : vector<8xf32> to vector<8x1xf32>
    %626 = vector.broadcast %625 : vector<8x1xf32> to vector<8x10xf32>
    %627 = arith.subf %623, %626 : vector<8x10xf32>
    %628 = math.exp %627 : vector<8x10xf32>
    %cst_333 = arith.constant dense<0.000000e+00> : vector<8xf32>
    %629 = vector.multi_reduction <add>, %628, %cst_333 [1] : vector<8x10xf32> to vector<8xf32>
    %630 = vector.shape_cast %629 : vector<8xf32> to vector<8x1xf32>
    %631 = math.log %630 : vector<8x1xf32>
    %632 = vector.broadcast %631 : vector<8x1xf32> to vector<8x10xf32>
    %633 = arith.subf %627, %632 : vector<8x10xf32>
    %c0_334 = arith.constant 0 : index
    %c0_335 = arith.constant 0 : index
    %634 = vector.load %arg6[%c0_334, %c0_335] : memref<8x10xf32, #tpu.memory_space<vmem>>, vector<8x10xf32>
    tpu.vector_store %arg6[%c0_334, %c0_335], %633 {strides = array<i32>} : memref<8x10xf32, #tpu.memory_space<vmem>>, vector<8x10xf32>,
    return
  }
  func.func @transform_0(%arg0: i32) -> i32 {
    %c0_i32 = arith.constant 0 : i32
    %c0_i32_0 = arith.constant 0 : i32
    return %c0_i32 : i32
  }
  func.func @transform_1(%arg0: i32) -> i32 {
    %c0_i32 = arith.constant 0 : i32
    %c0_i32_0 = arith.constant 0 : i32
    return %c0_i32 : i32
  }
  func.func @transform_2(%arg0: i32) -> (i32, i32, i32) {
    %c0_i32 = arith.constant 0 : i32
    %c0_i32_0 = arith.constant 0 : i32
    %c0_i32_1 = arith.constant 0 : i32
    return %c0_i32, %arg0, %c0_i32_0 : i32, i32, i32
  }
  func.func @transform_3(%arg0: i32) -> (i32, i32, i32) {
    %c0_i32 = arith.constant 0 : i32
    %c0_i32_0 = arith.constant 0 : i32
    %c0_i32_1 = arith.constant 0 : i32
    %c0_i32_2 = arith.constant 0 : i32
    return %c0_i32, %c0_i32_0, %c0_i32_1 : i32, i32, i32
  }
  func.func @transform_4(%arg0: i32) -> (i32, i32) {
    %c0_i32 = arith.constant 0 : i32
    %c0_i32_0 = arith.constant 0 : i32
    %c0_i32_1 = arith.constant 0 : i32
    return %c0_i32, %c0_i32_0 : i32, i32
  }
  func.func @transform_5(%arg0: i32) -> (i32, i32) {
    %c0_i32 = arith.constant 0 : i32
    %c0_i32_0 = arith.constant 0 : i32
    return %arg0, %c0_i32 : i32, i32
  }
}

</mosaic_0001>

<llo_original>
// kernel: simple_cnn_forward.1
$region0: #{simple_cnn_forward.1}
  #allocation0 [shape = 'u32[]', space=smem, size = 0x4, offset = 0x4, fixed_abs, tag = 'smem constant byte address 0x4 - core index']
  #allocation1 [shape = 'u32[144,128]{1,0:T(1,128)}', space=vmem, size = 0x12000, scoped, tag = 'internal scratch']
  %s0 = inlined_call_operand.vmem [shape: f32[90], index: 0, kind: input, shape index: {}]
  %s1 = inlined_call_operand.vmem [shape: f32[10], index: 1, kind: input, shape index: {}]
  %s2 = inlined_call_operand.vmem [shape: f32[4,8,225], index: 2, kind: input, shape index: {}]
  %s3 = inlined_call_operand.vmem [shape: f32[10,10,209], index: 3, kind: input, shape index: {}]
  %s4 = inlined_call_operand.vmem [shape: f32[1,10], index: 4, kind: input, shape index: {}]
  %s5 = inlined_call_operand.vmem [shape: f32[8,10], index: 5, kind: output, shape index: {}]
  %s6 = sld [smem:[#allocation0]]
  $region38: #{simple_cnn_forward.1} parent=0
    _
  %s8 = ssub.s32 1, %s6
  %s9 = scalar_select 0, %s8, %s6
  $region1: #{simple_cnn_forward.1} parent=0
    #allocation2 [shape = 'u8[512]{0}', space=smem, size = 0x200, scoped, tag = 'input window, operand 0, single buffered']
    #allocation3 [shape = 's32[1]{0}', space=sflag, size = 0x4, scoped, tag = 'scoped memory for simple_cnn_forward.1']
    #allocation4 [shape = 'u8[512]{0}', space=smem, size = 0x200, scoped, tag = 'input window, operand 1, single buffered']
    #allocation5 [shape = 's32[1]{0}', space=sflag, size = 0x4, scoped, tag = 'scoped memory for simple_cnn_forward.1']
    %10 = vsyncpa [#allocation3], 0
    %11 = vsyncpa [#allocation5], 0
    // Predicated region
    $region2: #{simple_cnn_forward.1} parent=1 // pred_check
      _
    $region3: #{simple_cnn_forward.1} parent=1 // pred_check_branch
      %13 = sbr.rel (0) target = $region5
    $region4: #{simple_cnn_forward.1} parent=1 // pred_region
      %s15 = ssub.s32 16, 16
      %16 = vsyncadd [#allocation3], %s15
      %s18 = sshll.u32 %s0, 4
      %s19 = int_to_ptr.vmem [resolvable:$true] %s18
      %21 = dma.vmem_to_smem %s19, 16, [#allocation2], [#allocation3]
    $region5: #{simple_cnn_forward.1} parent=1 // pred_fallthru
      _
    // Predicated region
    $region6: #{simple_cnn_forward.1} parent=1 // pred_check
      _
    $region7: #{simple_cnn_forward.1} parent=1 // pred_check_branch
      %23 = sbr.rel (0) target = $region9
    $region8: #{simple_cnn_forward.1} parent=1 // pred_region
      %s25 = ssub.s32 16, 16
      %26 = vsyncadd [#allocation5], %s25
      %s28 = sshll.u32 %s1, 4
      %s29 = int_to_ptr.vmem [resolvable:$true] %s28
      %31 = dma.vmem_to_smem %s29, 16, [#allocation4], [#allocation5]
    $region9: #{simple_cnn_forward.1} parent=1 // pred_fallthru
      _
    // Predicated region
    $region10: #{simple_cnn_forward.1} parent=1 // pred_check
      _
    $region11: #{simple_cnn_forward.1} parent=1 // pred_check_branch
      %33 = sbr.rel (0) target = $region13
    $region12: #{simple_cnn_forward.1} parent=1 // pred_region
      _
    $region13: #{simple_cnn_forward.1} parent=1 // pred_fallthru
      _
    // Predicated region
    $region14: #{simple_cnn_forward.1} parent=1 // pred_check
      _
    $region15: #{simple_cnn_forward.1} parent=1 // pred_check_branch
      %35 = sbr.rel (0) target = $region17
    $region16: #{simple_cnn_forward.1} parent=1 // pred_region
      _
    $region17: #{simple_cnn_forward.1} parent=1 // pred_fallthru
      _
    // Predicated region
    $region18: #{simple_cnn_forward.1} parent=1 // pred_check
      _
    $region19: #{simple_cnn_forward.1} parent=1 // pred_check_branch
      %37 = sbr.rel (0) target = $region21
    $region20: #{simple_cnn_forward.1} parent=1 // pred_region
      _
    $region21: #{simple_cnn_forward.1} parent=1 // pred_fallthru
      _
    // Predicated region
    $region22: #{simple_cnn_forward.1} parent=1 // pred_check
      _
    $region23: #{simple_cnn_forward.1} parent=1 // pred_check_branch
      %39 = sbr.rel (0) target = $region25
    $region24: #{simple_cnn_forward.1} parent=1 // pred_region
      %40 = dma.done [#allocation3], 16
    $region25: #{simple_cnn_forward.1} parent=1 // pred_fallthru
      _
    // Predicated region
    $region26: #{simple_cnn_forward.1} parent=1 // pred_check
      _
    $region27: #{simple_cnn_forward.1} parent=1 // pred_check_branch
      %42 = sbr.rel (0) target = $region29
    $region28: #{simple_cnn_forward.1} parent=1 // pred_region
      %43 = dma.done [#allocation5], 16
    $region29: #{simple_cnn_forward.1} parent=1 // pred_fallthru
      _
    %44 = sfence
    %v45 = vld [vmem:[%s2] sm:$0xff]
    %v46 = vld [vmem:[%s2 + $0x8] sm:$0xff]
    %s47 = sld [smem:[#allocation2]]
    %v48 = vstv %s47
    %v49 = vmul.f32 %v45, %v48
    %v50 = vmul.f32 %v46, %v48
    %s51 = scalar_lea.vmem %s2, 16
    %v52 = vld [vmem:[%s51] sm:$0xff]
    %v53 = vld [vmem:[%s51 + $0x8] sm:$0xff]
    %s54 = sld [smem:[#allocation2 + $0x1]]
    %v55 = vstv %s54
    %v56 = vmul.f32 %v52, %v55
    %v57 = vmul.f32 %v53, %v55
    %v58 = vadd.f32 %v49, %v56
    %v59 = vadd.f32 %v50, %v57
    %s60 = sld [smem:[#allocation2 + $0x2]]
    %v61 = vstv %s60
    %v62 = vmul.f32 %v45, %v61
    %v63 = vmul.f32 %v46, %v61
    %66 = vrot.lane.b32.xlu0 %v62, 127
    %v67 = vpop.permute.xlu0 %66
    %68 = vrot.lane.b32.xlu0 %v63, 127
    %v69 = vpop.permute.xlu0 %68
    %vm70 = vcmask 1039360
    %v71 = vsel %vm70, %v67, %v69
    %v74 = vadd.f32 %v58, %v71
    %v75 = vadd.f32 %v59, %v69
    %s76 = scalar_lea.vmem %s2, 32
    %v77 = vld [vmem:[%s76] sm:$0xff]
    %v78 = vld [vmem:[%s76 + $0x8] sm:$0xff]
    %s79 = sld [smem:[#allocation2 + $0x3]]
    %v80 = vstv %s79
    %v81 = vmul.f32 %v77, %v80
    %v82 = vmul.f32 %v78, %v80
    %v83 = vadd.f32 %v74, %v81
    %v84 = vadd.f32 %v75, %v82
    %s85 = scalar_lea.vmem %s2, 48
    %v86 = vld [vmem:[%s85] sm:$0xff]
    %v87 = vld [vmem:[%s85 + $0x8] sm:$0xff]
    %s88 = sld [smem:[#allocation2 + $0x4]]
    %v89 = vstv %s88
    %v90 = vmul.f32 %v86, %v89
    %v91 = vmul.f32 %v87, %v89
    %v92 = vadd.f32 %v83, %v90
    %v93 = vadd.f32 %v84, %v91
    %s94 = sld [smem:[#allocation2 + $0x5]]
    %v95 = vstv %s94
    %v96 = vmul.f32 %v77, %v95
    %v97 = vmul.f32 %v78, %v95
    %100 = vrot.lane.b32.xlu0 %v96, 127
    %v101 = vpop.permute.xlu0 %100
    %102 = vrot.lane.b32.xlu0 %v97, 127
    %v103 = vpop.permute.xlu0 %102
    %v104 = vsel %vm70, %v101, %v103
    %v107 = vadd.f32 %v92, %v104
    %v108 = vadd.f32 %v93, %v103
    %s109 = sld [smem:[#allocation2 + $0x6]]
    %v110 = vstv %s109
    %v111 = vmul.f32 %v45, %v110
    %v112 = vmul.f32 %v46, %v110
    %115 = vrot.lane.b32.xlu0 %v111, 113
    %v116 = vpop.permute.xlu0 %115
    %117 = vrot.lane.b32.xlu0 %v112, 113
    %v118 = vpop.permute.xlu0 %117
    %vm119 = vcmask 924672
    %v120 = vsel %vm119, %v116, %v118
    %v123 = vadd.f32 %v107, %v120
    %v124 = vadd.f32 %v108, %v118
    %s125 = sld [smem:[#allocation2 + $0x7]]
    %v126 = vstv %s125
    %v127 = vmul.f32 %v52, %v126
    %v128 = vmul.f32 %v53, %v126
    %131 = vrot.lane.b32.xlu0 %v127, 113
    %v132 = vpop.permute.xlu0 %131
    %133 = vrot.lane.b32.xlu0 %v128, 113
    %v134 = vpop.permute.xlu0 %133
    %v135 = vsel %vm119, %v132, %v134
    %v138 = vadd.f32 %v123, %v135
    %v139 = vadd.f32 %v124, %v134
    %s140 = sld [smem:[#allocation2 + $0x8]]
    %v141 = vstv %s140
    %v142 = vmul.f32 %v45, %v141
    %v143 = vmul.f32 %v46, %v141
    %146 = vrot.lane.b32.xlu0 %v142, 112
    %v147 = vpop.permute.xlu0 %146
    %148 = vrot.lane.b32.xlu0 %v143, 112
    %v149 = vpop.permute.xlu0 %148
    %vm150 = vcmask 916480
    %v151 = vsel %vm150, %v147, %v149
    %v154 = vadd.f32 %v138, %v151
    %v155 = vadd.f32 %v139, %v149
    %s156 = sld [smem:[#allocation4]]
    %v157 = vstv %s156
    %v158 = vadd.f32 %v154, %v157
    %v159 = vadd.f32 %v155, %v157
    %v160 = vmax.f32 %v158, 0.0
    %v161 = vmax.f32 %v159, 0.0
    %v162 = vld [vmem:[%s3] sm:$0xff]
    %v163 = vld [vmem:[%s3 + $0x8] sm:$0xff]
    %v164 = vld [vmem:[%s3 + $0x10] sm:$0x3]
    %v165 = vld [vmem:[%s3 + $0x18] sm:$0x3]
    %s166 = sld [smem:[#allocation2 + $0x9]]
    %v167 = vstv %s166
    %v168 = vmul.f32 %v45, %v167
    %v169 = vmul.f32 %v46, %v167
    %s170 = sld [smem:[#allocation2 + $0xa]]
    %v171 = vstv %s170
    %v172 = vmul.f32 %v52, %v171
    %v173 = vmul.f32 %v53, %v171
    %v174 = vadd.f32 %v168, %v172
    %v175 = vadd.f32 %v169, %v173
    %s176 = sld [smem:[#allocation2 + $0xb]]
    %v177 = vstv %s176
    %v178 = vmul.f32 %v45, %v177
    %v179 = vmul.f32 %v46, %v177
    %182 = vrot.lane.b32.xlu0 %v178, 127
    %v183 = vpop.permute.xlu0 %182
    %184 = vrot.lane.b32.xlu0 %v179, 127
    %v185 = vpop.permute.xlu0 %184
    %v186 = vsel %vm70, %v183, %v185
    %v189 = vadd.f32 %v174, %v186
    %v190 = vadd.f32 %v175, %v185
    %s191 = sld [smem:[#allocation2 + $0xc]]
    %v192 = vstv %s191
    %v193 = vmul.f32 %v77, %v192
    %v194 = vmul.f32 %v78, %v192
    %v195 = vadd.f32 %v189, %v193
    %v196 = vadd.f32 %v190, %v194
    %s197 = sld [smem:[#allocation2 + $0xd]]
    %v198 = vstv %s197
    %v199 = vmul.f32 %v86, %v198
    %v200 = vmul.f32 %v87, %v198
    %v201 = vadd.f32 %v195, %v199
    %v202 = vadd.f32 %v196, %v200
    %s203 = sld [smem:[#allocation2 + $0xe]]
    %v204 = vstv %s203
    %v205 = vmul.f32 %v77, %v204
    %v206 = vmul.f32 %v78, %v204
    %209 = vrot.lane.b32.xlu0 %v205, 127
    %v210 = vpop.permute.xlu0 %209
    %211 = vrot.lane.b32.xlu0 %v206, 127
    %v212 = vpop.permute.xlu0 %211
    %v213 = vsel %vm70, %v210, %v212
    %v216 = vadd.f32 %v201, %v213
    %v217 = vadd.f32 %v202, %v212
    %s218 = sld [smem:[#allocation2 + $0xf]]
    %v219 = vstv %s218
    %v220 = vmul.f32 %v45, %v219
    %v221 = vmul.f32 %v46, %v219
    %224 = vrot.lane.b32.xlu0 %v220, 113
    %v225 = vpop.permute.xlu0 %224
    %226 = vrot.lane.b32.xlu0 %v221, 113
    %v227 = vpop.permute.xlu0 %226
    %v228 = vsel %vm119, %v225, %v227
    %v231 = vadd.f32 %v216, %v228
    %v232 = vadd.f32 %v217, %v227
    %s233 = sld [smem:[#allocation2 + $0x10]]
    %v234 = vstv %s233
    %v235 = vmul.f32 %v52, %v234
    %v236 = vmul.f32 %v53, %v234
    %239 = vrot.lane.b32.xlu0 %v235, 113
    %v240 = vpop.permute.xlu0 %239
    %241 = vrot.lane.b32.xlu0 %v236, 113
    %v242 = vpop.permute.xlu0 %241
    %v243 = vsel %vm119, %v240, %v242
    %v246 = vadd.f32 %v231, %v243
    %v247 = vadd.f32 %v232, %v242
    %s248 = sld [smem:[#allocation2 + $0x11]]
    %v249 = vstv %s248
    %v250 = vmul.f32 %v45, %v249
    %v251 = vmul.f32 %v46, %v249
    %254 = vrot.lane.b32.xlu0 %v250, 112
    %v255 = vpop.permute.xlu0 %254
    %256 = vrot.lane.b32.xlu0 %v251, 112
    %v257 = vpop.permute.xlu0 %256
    %v258 = vsel %vm150, %v255, %v257
    %v261 = vadd.f32 %v246, %v258
    %v262 = vadd.f32 %v247, %v257
    %s263 = sld [smem:[#allocation4 + $0x1]]
    %v264 = vstv %s263
    %v265 = vadd.f32 %v261, %v264
    %v266 = vadd.f32 %v262, %v264
    %v267 = vmax.f32 %v265, 0.0
    %v268 = vmax.f32 %v266, 0.0
    %s269 = scalar_lea.vmem %s3, 32
    %v270 = vld [vmem:[%s269] sm:$0xff]
    %v271 = vld [vmem:[%s269 + $0x8] sm:$0xff]
    %v272 = vld [vmem:[%s269 + $0x10] sm:$0x3]
    %v273 = vld [vmem:[%s269 + $0x18] sm:$0x3]
    %vm274 = vcmask 662528
    %v276 = vsel %vm274, %v268, 0
    %v279 = vsel %vm274, %v271, 0
    %v282 = vsel %vm274, %v273, 0
    %284 = vmatprep.subr.mxu0 0.0
    %285 = vmatpush1.xpose.msra.mxu0 0.0
    %286 = vmatprep.subr.mxu0 0.0
    %287 = vmatpush1.xpose.msra.mxu0 0.0
    %288 = vmatprep.subr.mxu0 0.0
    %289 = vmatpush1.xpose.msra.mxu0 0.0
    %290 = vmatprep.subr.mxu0 0.0
    %291 = vmatpush1.xpose.msra.mxu0 0.0
    %292 = vmatprep.subr.mxu0 0.0
    %293 = vmatpush1.xpose.msra.mxu0 0.0
    %294 = vmatprep.subr.mxu0 0.0
    %295 = vmatpush1.xpose.msra.mxu0 0.0
    %296 = vmatprep.subr.mxu0 0.0
    %297 = vmatpush1.xpose.msra.mxu0 0.0
    %298 = vmatprep.subr.mxu0 0.0
    %299 = vmatpush1.xpose.msra.mxu0 0.0
    %300 = vmatprep.subr.mxu0 0.0
    %301 = vmatpush1.xpose.msra.mxu0 0.0
    %302 = vmatprep.subr.mxu0 0.0
    %303 = vmatpush1.xpose.msra.mxu0 0.0
    %304 = vmatprep.subr.mxu0 0.0
    %305 = vmatpush1.xpose.msra.mxu0 0.0
    %306 = vmatprep.subr.mxu0 0.0
    %307 = vmatpush1.xpose.msra.mxu0 0.0
    %308 = vmatprep.subr.mxu0 0.0
    %309 = vmatpush1.xpose.msra.mxu0 0.0
    %310 = vmatprep.subr.mxu0 0.0
    %311 = vmatpush1.xpose.msra.mxu0 0.0
    %312 = vmatprep.subr.mxu0 %v282
    %313 = vmatpush1.xpose.msra.mxu0 %v272
    %314 = vmatprep.subr.mxu0 %v279
    %315 = vmatpush1.xpose.msra.mxu0 %v270
    %316 = vmatprep.subr.mxu0 0.0
    %317 = vmatpush2.xpose.msra.mxu0 0.0
    %318 = vmatprep.subr.mxu0 0.0
    %319 = vmatpush2.xpose.msra.mxu0 0.0
    %320 = vmatprep.subr.mxu0 0.0
    %321 = vmatpush2.xpose.msra.mxu0 0.0
    %322 = vmatprep.subr.mxu0 0.0
    %323 = vmatpush2.xpose.msra.mxu0 0.0
    %324 = vmatprep.subr.mxu0 0.0
    %325 = vmatpush2.xpose.msra.mxu0 0.0
    %326 = vmatprep.subr.mxu0 0.0
    %327 = vmatpush2.xpose.msra.mxu0 0.0
    %328 = vmatprep.subr.mxu0 0.0
    %329 = vmatpush2.xpose.msra.mxu0 0.0
    %330 = vmatprep.subr.mxu0 0.0
    %331 = vmatpush2.xpose.msra.mxu0 0.0
    %332 = vmatprep.subr.mxu0 0.0
    %333 = vmatpush2.xpose.msra.mxu0 0.0
    %334 = vmatprep.subr.mxu0 0.0
    %335 = vmatpush2.xpose.msra.mxu0 0.0
    %336 = vmatprep.subr.mxu0 0.0
    %337 = vmatpush2.xpose.msra.mxu0 0.0
    %338 = vmatprep.subr.mxu0 0.0
    %339 = vmatpush2.xpose.msra.mxu0 0.0
    %340 = vmatprep.subr.mxu0 0.0
    %341 = vmatpush2.xpose.msra.mxu0 0.0
    %342 = vmatprep.subr.mxu0 0.0
    %343 = vmatpush2.xpose.msra.mxu0 0.0
    %344 = vmatprep.subr.mxu0 0.0
    %345 = vmatpush2.xpose.msra.mxu0 0.0
    %346 = vmatprep.subr.mxu0 0.0
    %347 = vmatpush2.xpose.msra.mxu0 0.0
    %348 = vmatprep.mubr.f32.mxu0 %v276
    %349 = vmatmul.mubr.f32.gmra.mxu0 %v267
    %v350 = vpop.f32.mrf.mxu0
    %v351 = vadd.f32 0.0, %v350
    %v352 = vpop.f32.mrf.mxu0
    %353 = vdwg.mxu0
    %v355 = vsel %vm274, %v161, 0
    %v358 = vsel %vm274, %v163, 0
    %v361 = vsel %vm274, %v165, 0
    %363 = vmatprep.subr.mxu0 0.0
    %364 = vmatpush1.xpose.msra.mxu0 0.0
    %365 = vmatprep.subr.mxu0 0.0
    %366 = vmatpush1.xpose.msra.mxu0 0.0
    %367 = vmatprep.subr.mxu0 0.0
    %368 = vmatpush1.xpose.msra.mxu0 0.0
    %369 = vmatprep.subr.mxu0 0.0
    %370 = vmatpush1.xpose.msra.mxu0 0.0
    %371 = vmatprep.subr.mxu0 0.0
    %372 = vmatpush1.xpose.msra.mxu0 0.0
    %373 = vmatprep.subr.mxu0 0.0
    %374 = vmatpush1.xpose.msra.mxu0 0.0
    %375 = vmatprep.subr.mxu0 0.0
    %376 = vmatpush1.xpose.msra.mxu0 0.0
    %377 = vmatprep.subr.mxu0 0.0
    %378 = vmatpush1.xpose.msra.mxu0 0.0
    %379 = vmatprep.subr.mxu0 0.0
    %380 = vmatpush1.xpose.msra.mxu0 0.0
    %381 = vmatprep.subr.mxu0 0.0
    %382 = vmatpush1.xpose.msra.mxu0 0.0
    %383 = vmatprep.subr.mxu0 0.0
    %384 = vmatpush1.xpose.msra.mxu0 0.0
    %385 = vmatprep.subr.mxu0 0.0
    %386 = vmatpush1.xpose.msra.mxu0 0.0
    %387 = vmatprep.subr.mxu0 0.0
    %388 = vmatpush1.xpose.msra.mxu0 0.0
    %389 = vmatprep.subr.mxu0 0.0
    %390 = vmatpush1.xpose.msra.mxu0 0.0
    %391 = vmatprep.subr.mxu0 %v361
    %392 = vmatpush1.xpose.msra.mxu0 %v164
    %393 = vmatprep.subr.mxu0 %v358
    %394 = vmatpush1.xpose.msra.mxu0 %v162
    %395 = vmatprep.subr.mxu0 0.0
    %396 = vmatpush2.xpose.msra.mxu0 0.0
    %397 = vmatprep.subr.mxu0 0.0
    %398 = vmatpush2.xpose.msra.mxu0 0.0
    %399 = vmatprep.subr.mxu0 0.0
    %400 = vmatpush2.xpose.msra.mxu0 0.0
    %401 = vmatprep.subr.mxu0 0.0
    %402 = vmatpush2.xpose.msra.mxu0 0.0
    %403 = vmatprep.subr.mxu0 0.0
    %404 = vmatpush2.xpose.msra.mxu0 0.0
    %405 = vmatprep.subr.mxu0 0.0
    %406 = vmatpush2.xpose.msra.mxu0 0.0
    %407 = vmatprep.subr.mxu0 0.0
    %408 = vmatpush2.xpose.msra.mxu0 0.0
    %409 = vmatprep.subr.mxu0 0.0
    %410 = vmatpush2.xpose.msra.mxu0 0.0
    %411 = vmatprep.subr.mxu0 0.0
    %412 = vmatpush2.xpose.msra.mxu0 0.0
    %413 = vmatprep.subr.mxu0 0.0
    %414 = vmatpush2.xpose.msra.mxu0 0.0
    %415 = vmatprep.subr.mxu0 0.0
    %416 = vmatpush2.xpose.msra.mxu0 0.0
    %417 = vmatprep.subr.mxu0 0.0
    %418 = vmatpush2.xpose.msra.mxu0 0.0
    %419 = vmatprep.subr.mxu0 0.0
    %420 = vmatpush2.xpose.msra.mxu0 0.0
    %421 = vmatprep.subr.mxu0 0.0
    %422 = vmatpush2.xpose.msra.mxu0 0.0
    %423 = vmatprep.subr.mxu0 0.0
    %424 = vmatpush2.xpose.msra.mxu0 0.0
    %425 = vmatprep.subr.mxu0 0.0
    %426 = vmatpush2.xpose.msra.mxu0 0.0
    %427 = vmatprep.mubr.f32.mxu0 %v355
    %428 = vmatmul.mubr.f32.gmra.mxu0 %v160
    %v429 = vpop.f32.mrf.mxu0
    %v430 = vadd.f32 %v351, %v429
    %v431 = vpop.f32.mrf.mxu0
    %432 = vdwg.mxu0
    %s433 = sld [smem:[#allocation2 + $0x12]]
    %v434 = vstv %s433
    %v435 = vmul.f32 %v45, %v434
    %v436 = vmul.f32 %v46, %v434
    %s437 = sld [smem:[#allocation2 + $0x13]]
    %v438 = vstv %s437
    %v439 = vmul.f32 %v52, %v438
    %v440 = vmul.f32 %v53, %v438
    %v441 = vadd.f32 %v435, %v439
    %v442 = vadd.f32 %v436, %v440
    %s443 = sld [smem:[#allocation2 + $0x14]]
    %v444 = vstv %s443
    %v445 = vmul.f32 %v45, %v444
    %v446 = vmul.f32 %v46, %v444
    %449 = vrot.lane.b32.xlu0 %v445, 127
    %v450 = vpop.permute.xlu0 %449
    %451 = vrot.lane.b32.xlu0 %v446, 127
    %v452 = vpop.permute.xlu0 %451
    %v453 = vsel %vm70, %v450, %v452
    %v456 = vadd.f32 %v441, %v453
    %v457 = vadd.f32 %v442, %v452
    %s458 = sld [smem:[#allocation2 + $0x15]]
    %v459 = vstv %s458
    %v460 = vmul.f32 %v77, %v459
    %v461 = vmul.f32 %v78, %v459
    %v462 = vadd.f32 %v456, %v460
    %v463 = vadd.f32 %v457, %v461
    %s464 = sld [smem:[#allocation2 + $0x16]]
    %v465 = vstv %s464
    %v466 = vmul.f32 %v86, %v465
    %v467 = vmul.f32 %v87, %v465
    %v468 = vadd.f32 %v462, %v466
    %v469 = vadd.f32 %v463, %v467
    %s470 = sld [smem:[#allocation2 + $0x17]]
    %v471 = vstv %s470
    %v472 = vmul.f32 %v77, %v471
    %v473 = vmul.f32 %v78, %v471
    %476 = vrot.lane.b32.xlu0 %v472, 127
    %v477 = vpop.permute.xlu0 %476
    %478 = vrot.lane.b32.xlu0 %v473, 127
    %v479 = vpop.permute.xlu0 %478
    %v480 = vsel %vm70, %v477, %v479
    %v483 = vadd.f32 %v468, %v480
    %v484 = vadd.f32 %v469, %v479
    %s485 = sld [smem:[#allocation2 + $0x18]]
    %v486 = vstv %s485
    %v487 = vmul.f32 %v45, %v486
    %v488 = vmul.f32 %v46, %v486
    %491 = vrot.lane.b32.xlu0 %v487, 113
    %v492 = vpop.permute.xlu0 %491
    %493 = vrot.lane.b32.xlu0 %v488, 113
    %v494 = vpop.permute.xlu0 %493
    %v495 = vsel %vm119, %v492, %v494
    %v498 = vadd.f32 %v483, %v495
    %v499 = vadd.f32 %v484, %v494
    %s500 = sld [smem:[#allocation2 + $0x19]]
    %v501 = vstv %s500
    %v502 = vmul.f32 %v52, %v501
    %v503 = vmul.f32 %v53, %v501
    %506 = vrot.lane.b32.xlu0 %v502, 113
    %v507 = vpop.permute.xlu0 %506
    %508 = vrot.lane.b32.xlu0 %v503, 113
    %v509 = vpop.permute.xlu0 %508
    %v510 = vsel %vm119, %v507, %v509
    %v513 = vadd.f32 %v498, %v510
    %v514 = vadd.f32 %v499, %v509
    %s515 = sld [smem:[#allocation2 + $0x1a]]
    %v516 = vstv %s515
    %v517 = vmul.f32 %v45, %v516
    %v518 = vmul.f32 %v46, %v516
    %521 = vrot.lane.b32.xlu0 %v517, 112
    %v522 = vpop.permute.xlu0 %521
    %523 = vrot.lane.b32.xlu0 %v518, 112
    %v524 = vpop.permute.xlu0 %523
    %v525 = vsel %vm150, %v522, %v524
    %v528 = vadd.f32 %v513, %v525
    %v529 = vadd.f32 %v514, %v524
    %s530 = sld [smem:[#allocation4 + $0x2]]
    %v531 = vstv %s530
    %v532 = vadd.f32 %v528, %v531
    %v533 = vadd.f32 %v529, %v531
    %v534 = vmax.f32 %v532, 0.0
    %v535 = vmax.f32 %v533, 0.0
    %s536 = scalar_lea.vmem %s3, 64
    %v537 = vld [vmem:[%s536] sm:$0xff]
    %v538 = vld [vmem:[%s536 + $0x8] sm:$0xff]
    %v539 = vld [vmem:[%s536 + $0x10] sm:$0x3]
    %v540 = vld [vmem:[%s536 + $0x18] sm:$0x3]
    %v542 = vsel %vm274, %v535, 0
    %v545 = vsel %vm274, %v538, 0
    %v548 = vsel %vm274, %v540, 0
    %550 = vmatprep.subr.mxu0 0.0
    %551 = vmatpush1.xpose.msra.mxu0 0.0
    %552 = vmatprep.subr.mxu0 0.0
    %553 = vmatpush1.xpose.msra.mxu0 0.0
    %554 = vmatprep.subr.mxu0 0.0
    %555 = vmatpush1.xpose.msra.mxu0 0.0
    %556 = vmatprep.subr.mxu0 0.0
    %557 = vmatpush1.xpose.msra.mxu0 0.0
    %558 = vmatprep.subr.mxu0 0.0
    %559 = vmatpush1.xpose.msra.mxu0 0.0
    %560 = vmatprep.subr.mxu0 0.0
    %561 = vmatpush1.xpose.msra.mxu0 0.0
    %562 = vmatprep.subr.mxu0 0.0
    %563 = vmatpush1.xpose.msra.mxu0 0.0
    %564 = vmatprep.subr.mxu0 0.0
    %565 = vmatpush1.xpose.msra.mxu0 0.0
    %566 = vmatprep.subr.mxu0 0.0
    %567 = vmatpush1.xpose.msra.mxu0 0.0
    %568 = vmatprep.subr.mxu0 0.0
    %569 = vmatpush1.xpose.msra.mxu0 0.0
    %570 = vmatprep.subr.mxu0 0.0
    %571 = vmatpush1.xpose.msra.mxu0 0.0
    %572 = vmatprep.subr.mxu0 0.0
    %573 = vmatpush1.xpose.msra.mxu0 0.0
    %574 = vmatprep.subr.mxu0 0.0
    %575 = vmatpush1.xpose.msra.mxu0 0.0
    %576 = vmatprep.subr.mxu0 0.0
    %577 = vmatpush1.xpose.msra.mxu0 0.0
    %578 = vmatprep.subr.mxu0 %v548
    %579 = vmatpush1.xpose.msra.mxu0 %v539
    %580 = vmatprep.subr.mxu0 %v545
    %581 = vmatpush1.xpose.msra.mxu0 %v537
    %582 = vmatprep.subr.mxu0 0.0
    %583 = vmatpush2.xpose.msra.mxu0 0.0
    %584 = vmatprep.subr.mxu0 0.0
    %585 = vmatpush2.xpose.msra.mxu0 0.0
    %586 = vmatprep.subr.mxu0 0.0
    %587 = vmatpush2.xpose.msra.mxu0 0.0
    %588 = vmatprep.subr.mxu0 0.0
    %589 = vmatpush2.xpose.msra.mxu0 0.0
    %590 = vmatprep.subr.mxu0 0.0
    %591 = vmatpush2.xpose.msra.mxu0 0.0
    %592 = vmatprep.subr.mxu0 0.0
    %593 = vmatpush2.xpose.msra.mxu0 0.0
    %594 = vmatprep.subr.mxu0 0.0
    %595 = vmatpush2.xpose.msra.mxu0 0.0
    %596 = vmatprep.subr.mxu0 0.0
    %597 = vmatpush2.xpose.msra.mxu0 0.0
    %598 = vmatprep.subr.mxu0 0.0
    %599 = vmatpush2.xpose.msra.mxu0 0.0
    %600 = vmatprep.subr.mxu0 0.0
    %601 = vmatpush2.xpose.msra.mxu0 0.0
    %602 = vmatprep.subr.mxu0 0.0
    %603 = vmatpush2.xpose.msra.mxu0 0.0
    %604 = vmatprep.subr.mxu0 0.0
    %605 = vmatpush2.xpose.msra.mxu0 0.0
    %606 = vmatprep.subr.mxu0 0.0
    %607 = vmatpush2.xpose.msra.mxu0 0.0
    %608 = vmatprep.subr.mxu0 0.0
    %609 = vmatpush2.xpose.msra.mxu0 0.0
    %610 = vmatprep.subr.mxu0 0.0
    %611 = vmatpush2.xpose.msra.mxu0 0.0
    %612 = vmatprep.subr.mxu0 0.0
    %613 = vmatpush2.xpose.msra.mxu0 0.0
    %614 = vmatprep.mubr.f32.mxu0 %v542
    %615 = vmatmul.mubr.f32.gmra.mxu0 %v534
    %v616 = vpop.f32.mrf.mxu0
    %v617 = vadd.f32 0.0, %v616
    %v618 = vpop.f32.mrf.mxu0
    %619 = vdwg.mxu0
    %v620 = vadd.f32 %v430, %v617
    %s621 = sld [smem:[#allocation2 + $0x1b]]
    %v622 = vstv %s621
    %v623 = vmul.f32 %v45, %v622
    %v624 = vmul.f32 %v46, %v622
    %s625 = sld [smem:[#allocation2 + $0x1c]]
    %v626 = vstv %s625
    %v627 = vmul.f32 %v52, %v626
    %v628 = vmul.f32 %v53, %v626
    %v629 = vadd.f32 %v623, %v627
    %v630 = vadd.f32 %v624, %v628
    %s631 = sld [smem:[#allocation2 + $0x1d]]
    %v632 = vstv %s631
    %v633 = vmul.f32 %v45, %v632
    %v634 = vmul.f32 %v46, %v632
    %637 = vrot.lane.b32.xlu0 %v633, 127
    %v638 = vpop.permute.xlu0 %637
    %639 = vrot.lane.b32.xlu0 %v634, 127
    %v640 = vpop.permute.xlu0 %639
    %v641 = vsel %vm70, %v638, %v640
    %v644 = vadd.f32 %v629, %v641
    %v645 = vadd.f32 %v630, %v640
    %s646 = sld [smem:[#allocation2 + $0x1e]]
    %v647 = vstv %s646
    %v648 = vmul.f32 %v77, %v647
    %v649 = vmul.f32 %v78, %v647
    %v650 = vadd.f32 %v644, %v648
    %v651 = vadd.f32 %v645, %v649
    %s652 = sld [smem:[#allocation2 + $0x1f]]
    %v653 = vstv %s652
    %v654 = vmul.f32 %v86, %v653
    %v655 = vmul.f32 %v87, %v653
    %v656 = vadd.f32 %v650, %v654
    %v657 = vadd.f32 %v651, %v655
    %s658 = sld [smem:[#allocation2 + $0x20]]
    %v659 = vstv %s658
    %v660 = vmul.f32 %v77, %v659
    %v661 = vmul.f32 %v78, %v659
    %664 = vrot.lane.b32.xlu0 %v660, 127
    %v665 = vpop.permute.xlu0 %664
    %666 = vrot.lane.b32.xlu0 %v661, 127
    %v667 = vpop.permute.xlu0 %666
    %v668 = vsel %vm70, %v665, %v667
    %v671 = vadd.f32 %v656, %v668
    %v672 = vadd.f32 %v657, %v667
    %s673 = sld [smem:[#allocation2 + $0x21]]
    %v674 = vstv %s673
    %v675 = vmul.f32 %v45, %v674
    %v676 = vmul.f32 %v46, %v674
    %679 = vrot.lane.b32.xlu0 %v675, 113
    %v680 = vpop.permute.xlu0 %679
    %681 = vrot.lane.b32.xlu0 %v676, 113
    %v682 = vpop.permute.xlu0 %681
    %v683 = vsel %vm119, %v680, %v682
    %v686 = vadd.f32 %v671, %v683
    %v687 = vadd.f32 %v672, %v682
    %s688 = sld [smem:[#allocation2 + $0x22]]
    %v689 = vstv %s688
    %v690 = vmul.f32 %v52, %v689
    %v691 = vmul.f32 %v53, %v689
    %694 = vrot.lane.b32.xlu0 %v690, 113
    %v695 = vpop.permute.xlu0 %694
    %696 = vrot.lane.b32.xlu0 %v691, 113
    %v697 = vpop.permute.xlu0 %696
    %v698 = vsel %vm119, %v695, %v697
    %v701 = vadd.f32 %v686, %v698
    %v702 = vadd.f32 %v687, %v697
    %s703 = sld [smem:[#allocation2 + $0x23]]
    %v704 = vstv %s703
    %v705 = vmul.f32 %v45, %v704
    %v706 = vmul.f32 %v46, %v704
    %709 = vrot.lane.b32.xlu0 %v705, 112
    %v710 = vpop.permute.xlu0 %709
    %711 = vrot.lane.b32.xlu0 %v706, 112
    %v712 = vpop.permute.xlu0 %711
    %v713 = vsel %vm150, %v710, %v712
    %v716 = vadd.f32 %v701, %v713
    %v717 = vadd.f32 %v702, %v712
    %s718 = sld [smem:[#allocation4 + $0x3]]
    %v719 = vstv %s718
    %v720 = vadd.f32 %v716, %v719
    %v721 = vadd.f32 %v717, %v719
    %v722 = vmax.f32 %v720, 0.0
    %v723 = vmax.f32 %v721, 0.0
    %s724 = scalar_lea.vmem %s3, 96
    %v725 = vld [vmem:[%s724] sm:$0xff]
    %v726 = vld [vmem:[%s724 + $0x8] sm:$0xff]
    %v727 = vld [vmem:[%s724 + $0x10] sm:$0x3]
    %v728 = vld [vmem:[%s724 + $0x18] sm:$0x3]
    %v730 = vsel %vm274, %v723, 0
    %v733 = vsel %vm274, %v726, 0
    %v736 = vsel %vm274, %v728, 0
    %738 = vmatprep.subr.mxu0 0.0
    %739 = vmatpush1.xpose.msra.mxu0 0.0
    %740 = vmatprep.subr.mxu0 0.0
    %741 = vmatpush1.xpose.msra.mxu0 0.0
    %742 = vmatprep.subr.mxu0 0.0
    %743 = vmatpush1.xpose.msra.mxu0 0.0
    %744 = vmatprep.subr.mxu0 0.0
    %745 = vmatpush1.xpose.msra.mxu0 0.0
    %746 = vmatprep.subr.mxu0 0.0
    %747 = vmatpush1.xpose.msra.mxu0 0.0
    %748 = vmatprep.subr.mxu0 0.0
    %749 = vmatpush1.xpose.msra.mxu0 0.0
    %750 = vmatprep.subr.mxu0 0.0
    %751 = vmatpush1.xpose.msra.mxu0 0.0
    %752 = vmatprep.subr.mxu0 0.0
    %753 = vmatpush1.xpose.msra.mxu0 0.0
    %754 = vmatprep.subr.mxu0 0.0
    %755 = vmatpush1.xpose.msra.mxu0 0.0
    %756 = vmatprep.subr.mxu0 0.0
    %757 = vmatpush1.xpose.msra.mxu0 0.0
    %758 = vmatprep.subr.mxu0 0.0
    %759 = vmatpush1.xpose.msra.mxu0 0.0
    %760 = vmatprep.subr.mxu0 0.0
    %761 = vmatpush1.xpose.msra.mxu0 0.0
    %762 = vmatprep.subr.mxu0 0.0
    %763 = vmatpush1.xpose.msra.mxu0 0.0
    %764 = vmatprep.subr.mxu0 0.0
    %765 = vmatpush1.xpose.msra.mxu0 0.0
    %766 = vmatprep.subr.mxu0 %v736
    %767 = vmatpush1.xpose.msra.mxu0 %v727
    %768 = vmatprep.subr.mxu0 %v733
    %769 = vmatpush1.xpose.msra.mxu0 %v725
    %770 = vmatprep.subr.mxu0 0.0
    %771 = vmatpush2.xpose.msra.mxu0 0.0
    %772 = vmatprep.subr.mxu0 0.0
    %773 = vmatpush2.xpose.msra.mxu0 0.0
    %774 = vmatprep.subr.mxu0 0.0
    %775 = vmatpush2.xpose.msra.mxu0 0.0
    %776 = vmatprep.subr.mxu0 0.0
    %777 = vmatpush2.xpose.msra.mxu0 0.0
    %778 = vmatprep.subr.mxu0 0.0
    %779 = vmatpush2.xpose.msra.mxu0 0.0
    %780 = vmatprep.subr.mxu0 0.0
    %781 = vmatpush2.xpose.msra.mxu0 0.0
    %782 = vmatprep.subr.mxu0 0.0
    %783 = vmatpush2.xpose.msra.mxu0 0.0
    %784 = vmatprep.subr.mxu0 0.0
    %785 = vmatpush2.xpose.msra.mxu0 0.0
    %786 = vmatprep.subr.mxu0 0.0
    %787 = vmatpush2.xpose.msra.mxu0 0.0
    %788 = vmatprep.subr.mxu0 0.0
    %789 = vmatpush2.xpose.msra.mxu0 0.0
    %790 = vmatprep.subr.mxu0 0.0
    %791 = vmatpush2.xpose.msra.mxu0 0.0
    %792 = vmatprep.subr.mxu0 0.0
    %793 = vmatpush2.xpose.msra.mxu0 0.0
    %794 = vmatprep.subr.mxu0 0.0
    %795 = vmatpush2.xpose.msra.mxu0 0.0
    %796 = vmatprep.subr.mxu0 0.0
    %797 = vmatpush2.xpose.msra.mxu0 0.0
    %798 = vmatprep.subr.mxu0 0.0
    %799 = vmatpush2.xpose.msra.mxu0 0.0
    %800 = vmatprep.subr.mxu0 0.0
    %801 = vmatpush2.xpose.msra.mxu0 0.0
    %802 = vmatprep.mubr.f32.mxu0 %v730
    %803 = vmatmul.mubr.f32.gmra.mxu0 %v722
    %v804 = vpop.f32.mrf.mxu0
    %v805 = vadd.f32 0.0, %v804
    %v806 = vpop.f32.mrf.mxu0
    %807 = vdwg.mxu0
    %v808 = vadd.f32 %v620, %v805
    %s809 = sld [smem:[#allocation2 + $0x24]]
    %v810 = vstv %s809
    %v811 = vmul.f32 %v45, %v810
    %v812 = vmul.f32 %v46, %v810
    %s813 = sld [smem:[#allocation2 + $0x25]]
    %v814 = vstv %s813
    %v815 = vmul.f32 %v52, %v814
    %v816 = vmul.f32 %v53, %v814
    %v817 = vadd.f32 %v811, %v815
    %v818 = vadd.f32 %v812, %v816
    %s819 = sld [smem:[#allocation2 + $0x26]]
    %v820 = vstv %s819
    %v821 = vmul.f32 %v45, %v820
    %v822 = vmul.f32 %v46, %v820
    %825 = vrot.lane.b32.xlu0 %v821, 127
    %v826 = vpop.permute.xlu0 %825
    %827 = vrot.lane.b32.xlu0 %v822, 127
    %v828 = vpop.permute.xlu0 %827
    %v829 = vsel %vm70, %v826, %v828
    %v832 = vadd.f32 %v817, %v829
    %v833 = vadd.f32 %v818, %v828
    %s834 = sld [smem:[#allocation2 + $0x27]]
    %v835 = vstv %s834
    %v836 = vmul.f32 %v77, %v835
    %v837 = vmul.f32 %v78, %v835
    %v838 = vadd.f32 %v832, %v836
    %v839 = vadd.f32 %v833, %v837
    %s840 = sld [smem:[#allocation2 + $0x28]]
    %v841 = vstv %s840
    %v842 = vmul.f32 %v86, %v841
    %v843 = vmul.f32 %v87, %v841
    %v844 = vadd.f32 %v838, %v842
    %v845 = vadd.f32 %v839, %v843
    %s846 = sld [smem:[#allocation2 + $0x29]]
    %v847 = vstv %s846
    %v848 = vmul.f32 %v77, %v847
    %v849 = vmul.f32 %v78, %v847
    %852 = vrot.lane.b32.xlu0 %v848, 127
    %v853 = vpop.permute.xlu0 %852
    %854 = vrot.lane.b32.xlu0 %v849, 127
    %v855 = vpop.permute.xlu0 %854
    %v856 = vsel %vm70, %v853, %v855
    %v859 = vadd.f32 %v844, %v856
    %v860 = vadd.f32 %v845, %v855
    %s861 = sld [smem:[#allocation2 + $0x2a]]
    %v862 = vstv %s861
    %v863 = vmul.f32 %v45, %v862
    %v864 = vmul.f32 %v46, %v862
    %867 = vrot.lane.b32.xlu0 %v863, 113
    %v868 = vpop.permute.xlu0 %867
    %869 = vrot.lane.b32.xlu0 %v864, 113
    %v870 = vpop.permute.xlu0 %869
    %v871 = vsel %vm119, %v868, %v870
    %v874 = vadd.f32 %v859, %v871
    %v875 = vadd.f32 %v860, %v870
    %s876 = sld [smem:[#allocation2 + $0x2b]]
    %v877 = vstv %s876
    %v878 = vmul.f32 %v52, %v877
    %v879 = vmul.f32 %v53, %v877
    %882 = vrot.lane.b32.xlu0 %v878, 113
    %v883 = vpop.permute.xlu0 %882
    %884 = vrot.lane.b32.xlu0 %v879, 113
    %v885 = vpop.permute.xlu0 %884
    %v886 = vsel %vm119, %v883, %v885
    %v889 = vadd.f32 %v874, %v886
    %v890 = vadd.f32 %v875, %v885
    %s891 = sld [smem:[#allocation2 + $0x2c]]
    %v892 = vstv %s891
    %v893 = vmul.f32 %v45, %v892
    %v894 = vmul.f32 %v46, %v892
    %897 = vrot.lane.b32.xlu0 %v893, 112
    %v898 = vpop.permute.xlu0 %897
    %899 = vrot.lane.b32.xlu0 %v894, 112
    %v900 = vpop.permute.xlu0 %899
    %v901 = vsel %vm150, %v898, %v900
    %v904 = vadd.f32 %v889, %v901
    %v905 = vadd.f32 %v890, %v900
    %s906 = sld [smem:[#allocation4 + $0x4]]
    %v907 = vstv %s906
    %v908 = vadd.f32 %v904, %v907
    %v909 = vadd.f32 %v905, %v907
    %v910 = vmax.f32 %v908, 0.0
    %v911 = vmax.f32 %v909, 0.0
    %s912 = scalar_lea.vmem %s3, 128
    %v913 = vld [vmem:[%s912] sm:$0xff]
    %v914 = vld [vmem:[%s912 + $0x8] sm:$0xff]
    %v915 = vld [vmem:[%s912 + $0x10] sm:$0x3]
    %v916 = vld [vmem:[%s912 + $0x18] sm:$0x3]
    %v918 = vsel %vm274, %v911, 0
    %v921 = vsel %vm274, %v914, 0
    %v924 = vsel %vm274, %v916, 0
    %926 = vmatprep.subr.mxu0 0.0
    %927 = vmatpush1.xpose.msra.mxu0 0.0
    %928 = vmatprep.subr.mxu0 0.0
    %929 = vmatpush1.xpose.msra.mxu0 0.0
    %930 = vmatprep.subr.mxu0 0.0
    %931 = vmatpush1.xpose.msra.mxu0 0.0
    %932 = vmatprep.subr.mxu0 0.0
    %933 = vmatpush1.xpose.msra.mxu0 0.0
    %934 = vmatprep.subr.mxu0 0.0
    %935 = vmatpush1.xpose.msra.mxu0 0.0
    %936 = vmatprep.subr.mxu0 0.0
    %937 = vmatpush1.xpose.msra.mxu0 0.0
    %938 = vmatprep.subr.mxu0 0.0
    %939 = vmatpush1.xpose.msra.mxu0 0.0
    %940 = vmatprep.subr.mxu0 0.0
    %941 = vmatpush1.xpose.msra.mxu0 0.0
    %942 = vmatprep.subr.mxu0 0.0
    %943 = vmatpush1.xpose.msra.mxu0 0.0
    %944 = vmatprep.subr.mxu0 0.0
    %945 = vmatpush1.xpose.msra.mxu0 0.0
    %946 = vmatprep.subr.mxu0 0.0
    %947 = vmatpush1.xpose.msra.mxu0 0.0
    %948 = vmatprep.subr.mxu0 0.0
    %949 = vmatpush1.xpose.msra.mxu0 0.0
    %950 = vmatprep.subr.mxu0 0.0
    %951 = vmatpush1.xpose.msra.mxu0 0.0
    %952 = vmatprep.subr.mxu0 0.0
    %953 = vmatpush1.xpose.msra.mxu0 0.0
    %954 = vmatprep.subr.mxu0 %v924
    %955 = vmatpush1.xpose.msra.mxu0 %v915
    %956 = vmatprep.subr.mxu0 %v921
    %957 = vmatpush1.xpose.msra.mxu0 %v913
    %958 = vmatprep.subr.mxu0 0.0
    %959 = vmatpush2.xpose.msra.mxu0 0.0
    %960 = vmatprep.subr.mxu0 0.0
    %961 = vmatpush2.xpose.msra.mxu0 0.0
    %962 = vmatprep.subr.mxu0 0.0
    %963 = vmatpush2.xpose.msra.mxu0 0.0
    %964 = vmatprep.subr.mxu0 0.0
    %965 = vmatpush2.xpose.msra.mxu0 0.0
    %966 = vmatprep.subr.mxu0 0.0
    %967 = vmatpush2.xpose.msra.mxu0 0.0
    %968 = vmatprep.subr.mxu0 0.0
    %969 = vmatpush2.xpose.msra.mxu0 0.0
    %970 = vmatprep.subr.mxu0 0.0
    %971 = vmatpush2.xpose.msra.mxu0 0.0
    %972 = vmatprep.subr.mxu0 0.0
    %973 = vmatpush2.xpose.msra.mxu0 0.0
    %974 = vmatprep.subr.mxu0 0.0
    %975 = vmatpush2.xpose.msra.mxu0 0.0
    %976 = vmatprep.subr.mxu0 0.0
    %977 = vmatpush2.xpose.msra.mxu0 0.0
    %978 = vmatprep.subr.mxu0 0.0
    %979 = vmatpush2.xpose.msra.mxu0 0.0
    %980 = vmatprep.subr.mxu0 0.0
    %981 = vmatpush2.xpose.msra.mxu0 0.0
    %982 = vmatprep.subr.mxu0 0.0
    %983 = vmatpush2.xpose.msra.mxu0 0.0
    %984 = vmatprep.subr.mxu0 0.0
    %985 = vmatpush2.xpose.msra.mxu0 0.0
    %986 = vmatprep.subr.mxu0 0.0
    %987 = vmatpush2.xpose.msra.mxu0 0.0
    %988 = vmatprep.subr.mxu0 0.0
    %989 = vmatpush2.xpose.msra.mxu0 0.0
    %990 = vmatprep.mubr.f32.mxu0 %v918
    %991 = vmatmul.mubr.f32.gmra.mxu0 %v910
    %v992 = vpop.f32.mrf.mxu0
    %v993 = vadd.f32 0.0, %v992
    %v994 = vpop.f32.mrf.mxu0
    %995 = vdwg.mxu0
    %v996 = vadd.f32 %v808, %v993
    %s997 = sld [smem:[#allocation2 + $0x2d]]
    %v998 = vstv %s997
    %v999 = vmul.f32 %v45, %v998
    %v1000 = vmul.f32 %v46, %v998
    %s1001 = sld [smem:[#allocation2 + $0x2e]]
    %v1002 = vstv %s1001
    %v1003 = vmul.f32 %v52, %v1002
    %v1004 = vmul.f32 %v53, %v1002
    %v1005 = vadd.f32 %v999, %v1003
    %v1006 = vadd.f32 %v1000, %v1004
    %s1007 = sld [smem:[#allocation2 + $0x2f]]
    %v1008 = vstv %s1007
    %v1009 = vmul.f32 %v45, %v1008
    %v1010 = vmul.f32 %v46, %v1008
    %1013 = vrot.lane.b32.xlu0 %v1009, 127
    %v1014 = vpop.permute.xlu0 %1013
    %1015 = vrot.lane.b32.xlu0 %v1010, 127
    %v1016 = vpop.permute.xlu0 %1015
    %v1017 = vsel %vm70, %v1014, %v1016
    %v1020 = vadd.f32 %v1005, %v1017
    %v1021 = vadd.f32 %v1006, %v1016
    %s1022 = sld [smem:[#allocation2 + $0x30]]
    %v1023 = vstv %s1022
    %v1024 = vmul.f32 %v77, %v1023
    %v1025 = vmul.f32 %v78, %v1023
    %v1026 = vadd.f32 %v1020, %v1024
    %v1027 = vadd.f32 %v1021, %v1025
    %s1028 = sld [smem:[#allocation2 + $0x31]]
    %v1029 = vstv %s1028
    %v1030 = vmul.f32 %v86, %v1029
    %v1031 = vmul.f32 %v87, %v1029
    %v1032 = vadd.f32 %v1026, %v1030
    %v1033 = vadd.f32 %v1027, %v1031
    %s1034 = sld [smem:[#allocation2 + $0x32]]
    %v1035 = vstv %s1034
    %v1036 = vmul.f32 %v77, %v1035
    %v1037 = vmul.f32 %v78, %v1035
    %1040 = vrot.lane.b32.xlu0 %v1036, 127
    %v1041 = vpop.permute.xlu0 %1040
    %1042 = vrot.lane.b32.xlu0 %v1037, 127
    %v1043 = vpop.permute.xlu0 %1042
    %v1044 = vsel %vm70, %v1041, %v1043
    %v1047 = vadd.f32 %v1032, %v1044
    %v1048 = vadd.f32 %v1033, %v1043
    %s1049 = sld [smem:[#allocation2 + $0x33]]
    %v1050 = vstv %s1049
    %v1051 = vmul.f32 %v45, %v1050
    %v1052 = vmul.f32 %v46, %v1050
    %1055 = vrot.lane.b32.xlu0 %v1051, 113
    %v1056 = vpop.permute.xlu0 %1055
    %1057 = vrot.lane.b32.xlu0 %v1052, 113
    %v1058 = vpop.permute.xlu0 %1057
    %v1059 = vsel %vm119, %v1056, %v1058
    %v1062 = vadd.f32 %v1047, %v1059
    %v1063 = vadd.f32 %v1048, %v1058
    %s1064 = sld [smem:[#allocation2 + $0x34]]
    %v1065 = vstv %s1064
    %v1066 = vmul.f32 %v52, %v1065
    %v1067 = vmul.f32 %v53, %v1065
    %1070 = vrot.lane.b32.xlu0 %v1066, 113
    %v1071 = vpop.permute.xlu0 %1070
    %1072 = vrot.lane.b32.xlu0 %v1067, 113
    %v1073 = vpop.permute.xlu0 %1072
    %v1074 = vsel %vm119, %v1071, %v1073
    %v1077 = vadd.f32 %v1062, %v1074
    %v1078 = vadd.f32 %v1063, %v1073
    %s1079 = sld [smem:[#allocation2 + $0x35]]
    %v1080 = vstv %s1079
    %v1081 = vmul.f32 %v45, %v1080
    %v1082 = vmul.f32 %v46, %v1080
    %1085 = vrot.lane.b32.xlu0 %v1081, 112
    %v1086 = vpop.permute.xlu0 %1085
    %1087 = vrot.lane.b32.xlu0 %v1082, 112
    %v1088 = vpop.permute.xlu0 %1087
    %v1089 = vsel %vm150, %v1086, %v1088
    %v1092 = vadd.f32 %v1077, %v1089
    %v1093 = vadd.f32 %v1078, %v1088
    %s1094 = sld [smem:[#allocation4 + $0x5]]
    %v1095 = vstv %s1094
    %v1096 = vadd.f32 %v1092, %v1095
    %v1097 = vadd.f32 %v1093, %v1095
    %v1098 = vmax.f32 %v1096, 0.0
    %v1099 = vmax.f32 %v1097, 0.0
    %s1100 = scalar_lea.vmem %s3, 160
    %v1101 = vld [vmem:[%s1100] sm:$0xff]
    %v1102 = vld [vmem:[%s1100 + $0x8] sm:$0xff]
    %v1103 = vld [vmem:[%s1100 + $0x10] sm:$0x3]
    %v1104 = vld [vmem:[%s1100 + $0x18] sm:$0x3]
    %v1106 = vsel %vm274, %v1099, 0
    %v1109 = vsel %vm274, %v1102, 0
    %v1112 = vsel %vm274, %v1104, 0
    %1114 = vmatprep.subr.mxu0 0.0
    %1115 = vmatpush1.xpose.msra.mxu0 0.0
    %1116 = vmatprep.subr.mxu0 0.0
    %1117 = vmatpush1.xpose.msra.mxu0 0.0
    %1118 = vmatprep.subr.mxu0 0.0
    %1119 = vmatpush1.xpose.msra.mxu0 0.0
    %1120 = vmatprep.subr.mxu0 0.0
    %1121 = vmatpush1.xpose.msra.mxu0 0.0
    %1122 = vmatprep.subr.mxu0 0.0
    %1123 = vmatpush1.xpose.msra.mxu0 0.0
    %1124 = vmatprep.subr.mxu0 0.0
    %1125 = vmatpush1.xpose.msra.mxu0 0.0
    %1126 = vmatprep.subr.mxu0 0.0
    %1127 = vmatpush1.xpose.msra.mxu0 0.0
    %1128 = vmatprep.subr.mxu0 0.0
    %1129 = vmatpush1.xpose.msra.mxu0 0.0
    %1130 = vmatprep.subr.mxu0 0.0
    %1131 = vmatpush1.xpose.msra.mxu0 0.0
    %1132 = vmatprep.subr.mxu0 0.0
    %1133 = vmatpush1.xpose.msra.mxu0 0.0
    %1134 = vmatprep.subr.mxu0 0.0
    %1135 = vmatpush1.xpose.msra.mxu0 0.0
    %1136 = vmatprep.subr.mxu0 0.0
    %1137 = vmatpush1.xpose.msra.mxu0 0.0
    %1138 = vmatprep.subr.mxu0 0.0
    %1139 = vmatpush1.xpose.msra.mxu0 0.0
    %1140 = vmatprep.subr.mxu0 0.0
    %1141 = vmatpush1.xpose.msra.mxu0 0.0
    %1142 = vmatprep.subr.mxu0 %v1112
    %1143 = vmatpush1.xpose.msra.mxu0 %v1103
    %1144 = vmatprep.subr.mxu0 %v1109
    %1145 = vmatpush1.xpose.msra.mxu0 %v1101
    %1146 = vmatprep.subr.mxu0 0.0
    %1147 = vmatpush2.xpose.msra.mxu0 0.0
    %1148 = vmatprep.subr.mxu0 0.0
    %1149 = vmatpush2.xpose.msra.mxu0 0.0
    %1150 = vmatprep.subr.mxu0 0.0
    %1151 = vmatpush2.xpose.msra.mxu0 0.0
    %1152 = vmatprep.subr.mxu0 0.0
    %1153 = vmatpush2.xpose.msra.mxu0 0.0
    %1154 = vmatprep.subr.mxu0 0.0
    %1155 = vmatpush2.xpose.msra.mxu0 0.0
    %1156 = vmatprep.subr.mxu0 0.0
    %1157 = vmatpush2.xpose.msra.mxu0 0.0
    %1158 = vmatprep.subr.mxu0 0.0
    %1159 = vmatpush2.xpose.msra.mxu0 0.0
    %1160 = vmatprep.subr.mxu0 0.0
    %1161 = vmatpush2.xpose.msra.mxu0 0.0
    %1162 = vmatprep.subr.mxu0 0.0
    %1163 = vmatpush2.xpose.msra.mxu0 0.0
    %1164 = vmatprep.subr.mxu0 0.0
    %1165 = vmatpush2.xpose.msra.mxu0 0.0
    %1166 = vmatprep.subr.mxu0 0.0
    %1167 = vmatpush2.xpose.msra.mxu0 0.0
    %1168 = vmatprep.subr.mxu0 0.0
    %1169 = vmatpush2.xpose.msra.mxu0 0.0
    %1170 = vmatprep.subr.mxu0 0.0
    %1171 = vmatpush2.xpose.msra.mxu0 0.0
    %1172 = vmatprep.subr.mxu0 0.0
    %1173 = vmatpush2.xpose.msra.mxu0 0.0
    %1174 = vmatprep.subr.mxu0 0.0
    %1175 = vmatpush2.xpose.msra.mxu0 0.0
    %1176 = vmatprep.subr.mxu0 0.0
    %1177 = vmatpush2.xpose.msra.mxu0 0.0
    %1178 = vmatprep.mubr.f32.mxu0 %v1106
    %1179 = vmatmul.mubr.f32.gmra.mxu0 %v1098
    %v1180 = vpop.f32.mrf.mxu0
    %v1181 = vadd.f32 0.0, %v1180
    %v1182 = vpop.f32.mrf.mxu0
    %1183 = vdwg.mxu0
    %v1184 = vadd.f32 %v996, %v1181
    %s1185 = sld [smem:[#allocation2 + $0x36]]
    %v1186 = vstv %s1185
    %v1187 = vmul.f32 %v45, %v1186
    %v1188 = vmul.f32 %v46, %v1186
    %s1189 = sld [smem:[#allocation2 + $0x37]]
    %v1190 = vstv %s1189
    %v1191 = vmul.f32 %v52, %v1190
    %v1192 = vmul.f32 %v53, %v1190
    %v1193 = vadd.f32 %v1187, %v1191
    %v1194 = vadd.f32 %v1188, %v1192
    %s1195 = sld [smem:[#allocation2 + $0x38]]
    %v1196 = vstv %s1195
    %v1197 = vmul.f32 %v45, %v1196
    %v1198 = vmul.f32 %v46, %v1196
    %1201 = vrot.lane.b32.xlu0 %v1197, 127
    %v1202 = vpop.permute.xlu0 %1201
    %1203 = vrot.lane.b32.xlu0 %v1198, 127
    %v1204 = vpop.permute.xlu0 %1203
    %v1205 = vsel %vm70, %v1202, %v1204
    %v1208 = vadd.f32 %v1193, %v1205
    %v1209 = vadd.f32 %v1194, %v1204
    %s1210 = sld [smem:[#allocation2 + $0x39]]
    %v1211 = vstv %s1210
    %v1212 = vmul.f32 %v77, %v1211
    %v1213 = vmul.f32 %v78, %v1211
    %v1214 = vadd.f32 %v1208, %v1212
    %v1215 = vadd.f32 %v1209, %v1213
    %s1216 = sld [smem:[#allocation2 + $0x3a]]
    %v1217 = vstv %s1216
    %v1218 = vmul.f32 %v86, %v1217
    %v1219 = vmul.f32 %v87, %v1217
    %v1220 = vadd.f32 %v1214, %v1218
    %v1221 = vadd.f32 %v1215, %v1219
    %s1222 = sld [smem:[#allocation2 + $0x3b]]
    %v1223 = vstv %s1222
    %v1224 = vmul.f32 %v77, %v1223
    %v1225 = vmul.f32 %v78, %v1223
    %1228 = vrot.lane.b32.xlu0 %v1224, 127
    %v1229 = vpop.permute.xlu0 %1228
    %1230 = vrot.lane.b32.xlu0 %v1225, 127
    %v1231 = vpop.permute.xlu0 %1230
    %v1232 = vsel %vm70, %v1229, %v1231
    %v1235 = vadd.f32 %v1220, %v1232
    %v1236 = vadd.f32 %v1221, %v1231
    %s1237 = sld [smem:[#allocation2 + $0x3c]]
    %v1238 = vstv %s1237
    %v1239 = vmul.f32 %v45, %v1238
    %v1240 = vmul.f32 %v46, %v1238
    %1243 = vrot.lane.b32.xlu0 %v1239, 113
    %v1244 = vpop.permute.xlu0 %1243
    %1245 = vrot.lane.b32.xlu0 %v1240, 113
    %v1246 = vpop.permute.xlu0 %1245
    %v1247 = vsel %vm119, %v1244, %v1246
    %v1250 = vadd.f32 %v1235, %v1247
    %v1251 = vadd.f32 %v1236, %v1246
    %s1252 = sld [smem:[#allocation2 + $0x3d]]
    %v1253 = vstv %s1252
    %v1254 = vmul.f32 %v52, %v1253
    %v1255 = vmul.f32 %v53, %v1253
    %1258 = vrot.lane.b32.xlu0 %v1254, 113
    %v1259 = vpop.permute.xlu0 %1258
    %1260 = vrot.lane.b32.xlu0 %v1255, 113
    %v1261 = vpop.permute.xlu0 %1260
    %v1262 = vsel %vm119, %v1259, %v1261
    %v1265 = vadd.f32 %v1250, %v1262
    %v1266 = vadd.f32 %v1251, %v1261
    %s1267 = sld [smem:[#allocation2 + $0x3e]]
    %v1268 = vstv %s1267
    %v1269 = vmul.f32 %v45, %v1268
    %v1270 = vmul.f32 %v46, %v1268
    %1273 = vrot.lane.b32.xlu0 %v1269, 112
    %v1274 = vpop.permute.xlu0 %1273
    %1275 = vrot.lane.b32.xlu0 %v1270, 112
    %v1276 = vpop.permute.xlu0 %1275
    %v1277 = vsel %vm150, %v1274, %v1276
    %v1280 = vadd.f32 %v1265, %v1277
    %v1281 = vadd.f32 %v1266, %v1276
    %s1282 = sld [smem:[#allocation4 + $0x6]]
    %v1283 = vstv %s1282
    %v1284 = vadd.f32 %v1280, %v1283
    %v1285 = vadd.f32 %v1281, %v1283
    %v1286 = vmax.f32 %v1284, 0.0
    %v1287 = vmax.f32 %v1285, 0.0
    %s1288 = scalar_lea.vmem %s3, 192
    %v1289 = vld [vmem:[%s1288] sm:$0xff]
    %v1290 = vld [vmem:[%s1288 + $0x8] sm:$0xff]
    %v1291 = vld [vmem:[%s1288 + $0x10] sm:$0x3]
    %v1292 = vld [vmem:[%s1288 + $0x18] sm:$0x3]
    %v1294 = vsel %vm274, %v1287, 0
    %v1297 = vsel %vm274, %v1290, 0
    %v1300 = vsel %vm274, %v1292, 0
    %1302 = vmatprep.subr.mxu0 0.0
    %1303 = vmatpush1.xpose.msra.mxu0 0.0
    %1304 = vmatprep.subr.mxu0 0.0
    %1305 = vmatpush1.xpose.msra.mxu0 0.0
    %1306 = vmatprep.subr.mxu0 0.0
    %1307 = vmatpush1.xpose.msra.mxu0 0.0
    %1308 = vmatprep.subr.mxu0 0.0
    %1309 = vmatpush1.xpose.msra.mxu0 0.0
    %1310 = vmatprep.subr.mxu0 0.0
    %1311 = vmatpush1.xpose.msra.mxu0 0.0
    %1312 = vmatprep.subr.mxu0 0.0
    %1313 = vmatpush1.xpose.msra.mxu0 0.0
    %1314 = vmatprep.subr.mxu0 0.0
    %1315 = vmatpush1.xpose.msra.mxu0 0.0
    %1316 = vmatprep.subr.mxu0 0.0
    %1317 = vmatpush1.xpose.msra.mxu0 0.0
    %1318 = vmatprep.subr.mxu0 0.0
    %1319 = vmatpush1.xpose.msra.mxu0 0.0
    %1320 = vmatprep.subr.mxu0 0.0
    %1321 = vmatpush1.xpose.msra.mxu0 0.0
    %1322 = vmatprep.subr.mxu0 0.0
    %1323 = vmatpush1.xpose.msra.mxu0 0.0
    %1324 = vmatprep.subr.mxu0 0.0
    %1325 = vmatpush1.xpose.msra.mxu0 0.0
    %1326 = vmatprep.subr.mxu0 0.0
    %1327 = vmatpush1.xpose.msra.mxu0 0.0
    %1328 = vmatprep.subr.mxu0 0.0
    %1329 = vmatpush1.xpose.msra.mxu0 0.0
    %1330 = vmatprep.subr.mxu0 %v1300
    %1331 = vmatpush1.xpose.msra.mxu0 %v1291
    %1332 = vmatprep.subr.mxu0 %v1297
    %1333 = vmatpush1.xpose.msra.mxu0 %v1289
    %1334 = vmatprep.subr.mxu0 0.0
    %1335 = vmatpush2.xpose.msra.mxu0 0.0
    %1336 = vmatprep.subr.mxu0 0.0
    %1337 = vmatpush2.xpose.msra.mxu0 0.0
    %1338 = vmatprep.subr.mxu0 0.0
    %1339 = vmatpush2.xpose.msra.mxu0 0.0
    %1340 = vmatprep.subr.mxu0 0.0
    %1341 = vmatpush2.xpose.msra.mxu0 0.0
    %1342 = vmatprep.subr.mxu0 0.0
    %1343 = vmatpush2.xpose.msra.mxu0 0.0
    %1344 = vmatprep.subr.mxu0 0.0
    %1345 = vmatpush2.xpose.msra.mxu0 0.0
    %1346 = vmatprep.subr.mxu0 0.0
    %1347 = vmatpush2.xpose.msra.mxu0 0.0
    %1348 = vmatprep.subr.mxu0 0.0
    %1349 = vmatpush2.xpose.msra.mxu0 0.0
    %1350 = vmatprep.subr.mxu0 0.0
    %1351 = vmatpush2.xpose.msra.mxu0 0.0
    %1352 = vmatprep.subr.mxu0 0.0
    %1353 = vmatpush2.xpose.msra.mxu0 0.0
    %1354 = vmatprep.subr.mxu0 0.0
    %1355 = vmatpush2.xpose.msra.mxu0 0.0
    %1356 = vmatprep.subr.mxu0 0.0
    %1357 = vmatpush2.xpose.msra.mxu0 0.0
    %1358 = vmatprep.subr.mxu0 0.0
    %1359 = vmatpush2.xpose.msra.mxu0 0.0
    %1360 = vmatprep.subr.mxu0 0.0
    %1361 = vmatpush2.xpose.msra.mxu0 0.0
    %1362 = vmatprep.subr.mxu0 0.0
    %1363 = vmatpush2.xpose.msra.mxu0 0.0
    %1364 = vmatprep.subr.mxu0 0.0
    %1365 = vmatpush2.xpose.msra.mxu0 0.0
    %1366 = vmatprep.mubr.f32.mxu0 %v1294
    %1367 = vmatmul.mubr.f32.gmra.mxu0 %v1286
    %v1368 = vpop.f32.mrf.mxu0
    %v1369 = vadd.f32 0.0, %v1368
    %v1370 = vpop.f32.mrf.mxu0
    %1371 = vdwg.mxu0
    %v1372 = vadd.f32 %v1184, %v1369
    %s1373 = sld [smem:[#allocation2 + $0x3f]]
    %v1374 = vstv %s1373
    %v1375 = vmul.f32 %v45, %v1374
    %v1376 = vmul.f32 %v46, %v1374
    %s1377 = sld [smem:[#allocation2 + $0x40]]
    %v1378 = vstv %s1377
    %v1379 = vmul.f32 %v52, %v1378
    %v1380 = vmul.f32 %v53, %v1378
    %v1381 = vadd.f32 %v1375, %v1379
    %v1382 = vadd.f32 %v1376, %v1380
    %s1383 = sld [smem:[#allocation2 + $0x41]]
    %v1384 = vstv %s1383
    %v1385 = vmul.f32 %v45, %v1384
    %v1386 = vmul.f32 %v46, %v1384
    %1389 = vrot.lane.b32.xlu0 %v1385, 127
    %v1390 = vpop.permute.xlu0 %1389
    %1391 = vrot.lane.b32.xlu0 %v1386, 127
    %v1392 = vpop.permute.xlu0 %1391
    %v1393 = vsel %vm70, %v1390, %v1392
    %v1396 = vadd.f32 %v1381, %v1393
    %v1397 = vadd.f32 %v1382, %v1392
    %s1398 = sld [smem:[#allocation2 + $0x42]]
    %v1399 = vstv %s1398
    %v1400 = vmul.f32 %v77, %v1399
    %v1401 = vmul.f32 %v78, %v1399
    %v1402 = vadd.f32 %v1396, %v1400
    %v1403 = vadd.f32 %v1397, %v1401
    %s1404 = sld [smem:[#allocation2 + $0x43]]
    %v1405 = vstv %s1404
    %v1406 = vmul.f32 %v86, %v1405
    %v1407 = vmul.f32 %v87, %v1405
    %v1408 = vadd.f32 %v1402, %v1406
    %v1409 = vadd.f32 %v1403, %v1407
    %s1410 = sld [smem:[#allocation2 + $0x44]]
    %v1411 = vstv %s1410
    %v1412 = vmul.f32 %v77, %v1411
    %v1413 = vmul.f32 %v78, %v1411
    %1416 = vrot.lane.b32.xlu0 %v1412, 127
    %v1417 = vpop.permute.xlu0 %1416
    %1418 = vrot.lane.b32.xlu0 %v1413, 127
    %v1419 = vpop.permute.xlu0 %1418
    %v1420 = vsel %vm70, %v1417, %v1419
    %v1423 = vadd.f32 %v1408, %v1420
    %v1424 = vadd.f32 %v1409, %v1419
    %s1425 = sld [smem:[#allocation2 + $0x45]]
    %v1426 = vstv %s1425
    %v1427 = vmul.f32 %v45, %v1426
    %v1428 = vmul.f32 %v46, %v1426
    %1431 = vrot.lane.b32.xlu0 %v1427, 113
    %v1432 = vpop.permute.xlu0 %1431
    %1433 = vrot.lane.b32.xlu0 %v1428, 113
    %v1434 = vpop.permute.xlu0 %1433
    %v1435 = vsel %vm119, %v1432, %v1434
    %v1438 = vadd.f32 %v1423, %v1435
    %v1439 = vadd.f32 %v1424, %v1434
    %s1440 = sld [smem:[#allocation2 + $0x46]]
    %v1441 = vstv %s1440
    %v1442 = vmul.f32 %v52, %v1441
    %v1443 = vmul.f32 %v53, %v1441
    %1446 = vrot.lane.b32.xlu0 %v1442, 113
    %v1447 = vpop.permute.xlu0 %1446
    %1448 = vrot.lane.b32.xlu0 %v1443, 113
    %v1449 = vpop.permute.xlu0 %1448
    %v1450 = vsel %vm119, %v1447, %v1449
    %v1453 = vadd.f32 %v1438, %v1450
    %v1454 = vadd.f32 %v1439, %v1449
    %s1455 = sld [smem:[#allocation2 + $0x47]]
    %v1456 = vstv %s1455
    %v1457 = vmul.f32 %v45, %v1456
    %v1458 = vmul.f32 %v46, %v1456
    %1461 = vrot.lane.b32.xlu0 %v1457, 112
    %v1462 = vpop.permute.xlu0 %1461
    %1463 = vrot.lane.b32.xlu0 %v1458, 112
    %v1464 = vpop.permute.xlu0 %1463
    %v1465 = vsel %vm150, %v1462, %v1464
    %v1468 = vadd.f32 %v1453, %v1465
    %v1469 = vadd.f32 %v1454, %v1464
    %s1470 = sld [smem:[#allocation4 + $0x7]]
    %v1471 = vstv %s1470
    %v1472 = vadd.f32 %v1468, %v1471
    %v1473 = vadd.f32 %v1469, %v1471
    %v1474 = vmax.f32 %v1472, 0.0
    %v1475 = vmax.f32 %v1473, 0.0
    %s1476 = scalar_lea.vmem %s3, 224
    %v1477 = vld [vmem:[%s1476] sm:$0xff]
    %v1478 = vld [vmem:[%s1476 + $0x8] sm:$0xff]
    %v1479 = vld [vmem:[%s1476 + $0x10] sm:$0x3]
    %v1480 = vld [vmem:[%s1476 + $0x18] sm:$0x3]
    %v1482 = vsel %vm274, %v1475, 0
    %v1485 = vsel %vm274, %v1478, 0
    %v1488 = vsel %vm274, %v1480, 0
    %1490 = vmatprep.subr.mxu0 0.0
    %1491 = vmatpush1.xpose.msra.mxu0 0.0
    %1492 = vmatprep.subr.mxu0 0.0
    %1493 = vmatpush1.xpose.msra.mxu0 0.0
    %1494 = vmatprep.subr.mxu0 0.0
    %1495 = vmatpush1.xpose.msra.mxu0 0.0
    %1496 = vmatprep.subr.mxu0 0.0
    %1497 = vmatpush1.xpose.msra.mxu0 0.0
    %1498 = vmatprep.subr.mxu0 0.0
    %1499 = vmatpush1.xpose.msra.mxu0 0.0
    %1500 = vmatprep.subr.mxu0 0.0
    %1501 = vmatpush1.xpose.msra.mxu0 0.0
    %1502 = vmatprep.subr.mxu0 0.0
    %1503 = vmatpush1.xpose.msra.mxu0 0.0
    %1504 = vmatprep.subr.mxu0 0.0
    %1505 = vmatpush1.xpose.msra.mxu0 0.0
    %1506 = vmatprep.subr.mxu0 0.0
    %1507 = vmatpush1.xpose.msra.mxu0 0.0
    %1508 = vmatprep.subr.mxu0 0.0
    %1509 = vmatpush1.xpose.msra.mxu0 0.0
    %1510 = vmatprep.subr.mxu0 0.0
    %1511 = vmatpush1.xpose.msra.mxu0 0.0
    %1512 = vmatprep.subr.mxu0 0.0
    %1513 = vmatpush1.xpose.msra.mxu0 0.0
    %1514 = vmatprep.subr.mxu0 0.0
    %1515 = vmatpush1.xpose.msra.mxu0 0.0
    %1516 = vmatprep.subr.mxu0 0.0
    %1517 = vmatpush1.xpose.msra.mxu0 0.0
    %1518 = vmatprep.subr.mxu0 %v1488
    %1519 = vmatpush1.xpose.msra.mxu0 %v1479
    %1520 = vmatprep.subr.mxu0 %v1485
    %1521 = vmatpush1.xpose.msra.mxu0 %v1477
    %1522 = vmatprep.subr.mxu0 0.0
    %1523 = vmatpush2.xpose.msra.mxu0 0.0
    %1524 = vmatprep.subr.mxu0 0.0
    %1525 = vmatpush2.xpose.msra.mxu0 0.0
    %1526 = vmatprep.subr.mxu0 0.0
    %1527 = vmatpush2.xpose.msra.mxu0 0.0
    %1528 = vmatprep.subr.mxu0 0.0
    %1529 = vmatpush2.xpose.msra.mxu0 0.0
    %1530 = vmatprep.subr.mxu0 0.0
    %1531 = vmatpush2.xpose.msra.mxu0 0.0
    %1532 = vmatprep.subr.mxu0 0.0
    %1533 = vmatpush2.xpose.msra.mxu0 0.0
    %1534 = vmatprep.subr.mxu0 0.0
    %1535 = vmatpush2.xpose.msra.mxu0 0.0
    %1536 = vmatprep.subr.mxu0 0.0
    %1537 = vmatpush2.xpose.msra.mxu0 0.0
    %1538 = vmatprep.subr.mxu0 0.0
    %1539 = vmatpush2.xpose.msra.mxu0 0.0
    %1540 = vmatprep.subr.mxu0 0.0
    %1541 = vmatpush2.xpose.msra.mxu0 0.0
    %1542 = vmatprep.subr.mxu0 0.0
    %1543 = vmatpush2.xpose.msra.mxu0 0.0
    %1544 = vmatprep.subr.mxu0 0.0
    %1545 = vmatpush2.xpose.msra.mxu0 0.0
    %1546 = vmatprep.subr.mxu0 0.0
    %1547 = vmatpush2.xpose.msra.mxu0 0.0
    %1548 = vmatprep.subr.mxu0 0.0
    %1549 = vmatpush2.xpose.msra.mxu0 0.0
    %1550 = vmatprep.subr.mxu0 0.0
    %1551 = vmatpush2.xpose.msra.mxu0 0.0
    %1552 = vmatprep.subr.mxu0 0.0
    %1553 = vmatpush2.xpose.msra.mxu0 0.0
    %1554 = vmatprep.mubr.f32.mxu0 %v1482
    %1555 = vmatmul.mubr.f32.gmra.mxu0 %v1474
    %v1556 = vpop.f32.mrf.mxu0
    %v1557 = vadd.f32 0.0, %v1556
    %v1558 = vpop.f32.mrf.mxu0
    %1559 = vdwg.mxu0
    %v1560 = vadd.f32 %v1372, %v1557
    %s1561 = sld [smem:[#allocation2 + $0x48]]
    %v1562 = vstv %s1561
    %v1563 = vmul.f32 %v45, %v1562
    %v1564 = vmul.f32 %v46, %v1562
    %s1565 = sld [smem:[#allocation2 + $0x49]]
    %v1566 = vstv %s1565
    %v1567 = vmul.f32 %v52, %v1566
    %v1568 = vmul.f32 %v53, %v1566
    %v1569 = vadd.f32 %v1563, %v1567
    %v1570 = vadd.f32 %v1564, %v1568
    %s1571 = sld [smem:[#allocation2 + $0x4a]]
    %v1572 = vstv %s1571
    %v1573 = vmul.f32 %v45, %v1572
    %v1574 = vmul.f32 %v46, %v1572
    %1577 = vrot.lane.b32.xlu0 %v1573, 127
    %v1578 = vpop.permute.xlu0 %1577
    %1579 = vrot.lane.b32.xlu0 %v1574, 127
    %v1580 = vpop.permute.xlu0 %1579
    %v1581 = vsel %vm70, %v1578, %v1580
    %v1584 = vadd.f32 %v1569, %v1581
    %v1585 = vadd.f32 %v1570, %v1580
    %s1586 = sld [smem:[#allocation2 + $0x4b]]
    %v1587 = vstv %s1586
    %v1588 = vmul.f32 %v77, %v1587
    %v1589 = vmul.f32 %v78, %v1587
    %v1590 = vadd.f32 %v1584, %v1588
    %v1591 = vadd.f32 %v1585, %v1589
    %s1592 = sld [smem:[#allocation2 + $0x4c]]
    %v1593 = vstv %s1592
    %v1594 = vmul.f32 %v86, %v1593
    %v1595 = vmul.f32 %v87, %v1593
    %v1596 = vadd.f32 %v1590, %v1594
    %v1597 = vadd.f32 %v1591, %v1595
    %s1598 = sld [smem:[#allocation2 + $0x4d]]
    %v1599 = vstv %s1598
    %v1600 = vmul.f32 %v77, %v1599
    %v1601 = vmul.f32 %v78, %v1599
    %1604 = vrot.lane.b32.xlu0 %v1600, 127
    %v1605 = vpop.permute.xlu0 %1604
    %1606 = vrot.lane.b32.xlu0 %v1601, 127
    %v1607 = vpop.permute.xlu0 %1606
    %v1608 = vsel %vm70, %v1605, %v1607
    %v1611 = vadd.f32 %v1596, %v1608
    %v1612 = vadd.f32 %v1597, %v1607
    %s1613 = sld [smem:[#allocation2 + $0x4e]]
    %v1614 = vstv %s1613
    %v1615 = vmul.f32 %v45, %v1614
    %v1616 = vmul.f32 %v46, %v1614
    %1619 = vrot.lane.b32.xlu0 %v1615, 113
    %v1620 = vpop.permute.xlu0 %1619
    %1621 = vrot.lane.b32.xlu0 %v1616, 113
    %v1622 = vpop.permute.xlu0 %1621
    %v1623 = vsel %vm119, %v1620, %v1622
    %v1626 = vadd.f32 %v1611, %v1623
    %v1627 = vadd.f32 %v1612, %v1622
    %s1628 = sld [smem:[#allocation2 + $0x4f]]
    %v1629 = vstv %s1628
    %v1630 = vmul.f32 %v52, %v1629
    %v1631 = vmul.f32 %v53, %v1629
    %1634 = vrot.lane.b32.xlu0 %v1630, 113
    %v1635 = vpop.permute.xlu0 %1634
    %1636 = vrot.lane.b32.xlu0 %v1631, 113
    %v1637 = vpop.permute.xlu0 %1636
    %v1638 = vsel %vm119, %v1635, %v1637
    %v1641 = vadd.f32 %v1626, %v1638
    %v1642 = vadd.f32 %v1627, %v1637
    %s1643 = sld [smem:[#allocation2 + $0x50]]
    %v1644 = vstv %s1643
    %v1645 = vmul.f32 %v45, %v1644
    %v1646 = vmul.f32 %v46, %v1644
    %1649 = vrot.lane.b32.xlu0 %v1645, 112
    %v1650 = vpop.permute.xlu0 %1649
    %1651 = vrot.lane.b32.xlu0 %v1646, 112
    %v1652 = vpop.permute.xlu0 %1651
    %v1653 = vsel %vm150, %v1650, %v1652
    %v1656 = vadd.f32 %v1641, %v1653
    %v1657 = vadd.f32 %v1642, %v1652
    %s1658 = sld [smem:[#allocation4 + $0x8]]
    %v1659 = vstv %s1658
    %v1660 = vadd.f32 %v1656, %v1659
    %v1661 = vadd.f32 %v1657, %v1659
    %v1662 = vmax.f32 %v1660, 0.0
    %v1663 = vmax.f32 %v1661, 0.0
    %s1664 = scalar_lea.vmem %s3, 256
    %v1665 = vld [vmem:[%s1664] sm:$0xff]
    %v1666 = vld [vmem:[%s1664 + $0x8] sm:$0xff]
    %v1667 = vld [vmem:[%s1664 + $0x10] sm:$0x3]
    %v1668 = vld [vmem:[%s1664 + $0x18] sm:$0x3]
    %v1670 = vsel %vm274, %v1663, 0
    %v1673 = vsel %vm274, %v1666, 0
    %v1676 = vsel %vm274, %v1668, 0
    %1678 = vmatprep.subr.mxu0 0.0
    %1679 = vmatpush1.xpose.msra.mxu0 0.0
    %1680 = vmatprep.subr.mxu0 0.0
    %1681 = vmatpush1.xpose.msra.mxu0 0.0
    %1682 = vmatprep.subr.mxu0 0.0
    %1683 = vmatpush1.xpose.msra.mxu0 0.0
    %1684 = vmatprep.subr.mxu0 0.0
    %1685 = vmatpush1.xpose.msra.mxu0 0.0
    %1686 = vmatprep.subr.mxu0 0.0
    %1687 = vmatpush1.xpose.msra.mxu0 0.0
    %1688 = vmatprep.subr.mxu0 0.0
    %1689 = vmatpush1.xpose.msra.mxu0 0.0
    %1690 = vmatprep.subr.mxu0 0.0
    %1691 = vmatpush1.xpose.msra.mxu0 0.0
    %1692 = vmatprep.subr.mxu0 0.0
    %1693 = vmatpush1.xpose.msra.mxu0 0.0
    %1694 = vmatprep.subr.mxu0 0.0
    %1695 = vmatpush1.xpose.msra.mxu0 0.0
    %1696 = vmatprep.subr.mxu0 0.0
    %1697 = vmatpush1.xpose.msra.mxu0 0.0
    %1698 = vmatprep.subr.mxu0 0.0
    %1699 = vmatpush1.xpose.msra.mxu0 0.0
    %1700 = vmatprep.subr.mxu0 0.0
    %1701 = vmatpush1.xpose.msra.mxu0 0.0
    %1702 = vmatprep.subr.mxu0 0.0
    %1703 = vmatpush1.xpose.msra.mxu0 0.0
    %1704 = vmatprep.subr.mxu0 0.0
    %1705 = vmatpush1.xpose.msra.mxu0 0.0
    %1706 = vmatprep.subr.mxu0 %v1676
    %1707 = vmatpush1.xpose.msra.mxu0 %v1667
    %1708 = vmatprep.subr.mxu0 %v1673
    %1709 = vmatpush1.xpose.msra.mxu0 %v1665
    %1710 = vmatprep.subr.mxu0 0.0
    %1711 = vmatpush2.xpose.msra.mxu0 0.0
    %1712 = vmatprep.subr.mxu0 0.0
    %1713 = vmatpush2.xpose.msra.mxu0 0.0
    %1714 = vmatprep.subr.mxu0 0.0
    %1715 = vmatpush2.xpose.msra.mxu0 0.0
    %1716 = vmatprep.subr.mxu0 0.0
    %1717 = vmatpush2.xpose.msra.mxu0 0.0
    %1718 = vmatprep.subr.mxu0 0.0
    %1719 = vmatpush2.xpose.msra.mxu0 0.0
    %1720 = vmatprep.subr.mxu0 0.0
    %1721 = vmatpush2.xpose.msra.mxu0 0.0
    %1722 = vmatprep.subr.mxu0 0.0
    %1723 = vmatpush2.xpose.msra.mxu0 0.0
    %1724 = vmatprep.subr.mxu0 0.0
    %1725 = vmatpush2.xpose.msra.mxu0 0.0
    %1726 = vmatprep.subr.mxu0 0.0
    %1727 = vmatpush2.xpose.msra.mxu0 0.0
    %1728 = vmatprep.subr.mxu0 0.0
    %1729 = vmatpush2.xpose.msra.mxu0 0.0
    %1730 = vmatprep.subr.mxu0 0.0
    %1731 = vmatpush2.xpose.msra.mxu0 0.0
    %1732 = vmatprep.subr.mxu0 0.0
    %1733 = vmatpush2.xpose.msra.mxu0 0.0
    %1734 = vmatprep.subr.mxu0 0.0
    %1735 = vmatpush2.xpose.msra.mxu0 0.0
    %1736 = vmatprep.subr.mxu0 0.0
    %1737 = vmatpush2.xpose.msra.mxu0 0.0
    %1738 = vmatprep.subr.mxu0 0.0
    %1739 = vmatpush2.xpose.msra.mxu0 0.0
    %1740 = vmatprep.subr.mxu0 0.0
    %1741 = vmatpush2.xpose.msra.mxu0 0.0
    %1742 = vmatprep.mubr.f32.mxu0 %v1670
    %1743 = vmatmul.mubr.f32.gmra.mxu0 %v1662
    %v1744 = vpop.f32.mrf.mxu0
    %v1745 = vadd.f32 0.0, %v1744
    %v1746 = vpop.f32.mrf.mxu0
    %1747 = vdwg.mxu0
    %v1748 = vadd.f32 %v1560, %v1745
    %s1749 = sld [smem:[#allocation2 + $0x51]]
    %v1750 = vstv %s1749
    %v1751 = vmul.f32 %v45, %v1750
    %v1752 = vmul.f32 %v46, %v1750
    %s1753 = sld [smem:[#allocation2 + $0x52]]
    %v1754 = vstv %s1753
    %v1755 = vmul.f32 %v52, %v1754
    %v1756 = vmul.f32 %v53, %v1754
    %v1757 = vadd.f32 %v1751, %v1755
    %v1758 = vadd.f32 %v1752, %v1756
    %s1759 = sld [smem:[#allocation2 + $0x53]]
    %v1760 = vstv %s1759
    %v1761 = vmul.f32 %v45, %v1760
    %v1762 = vmul.f32 %v46, %v1760
    %1765 = vrot.lane.b32.xlu0 %v1761, 127
    %v1766 = vpop.permute.xlu0 %1765
    %1767 = vrot.lane.b32.xlu0 %v1762, 127
    %v1768 = vpop.permute.xlu0 %1767
    %v1769 = vsel %vm70, %v1766, %v1768
    %v1772 = vadd.f32 %v1757, %v1769
    %v1773 = vadd.f32 %v1758, %v1768
    %s1774 = sld [smem:[#allocation2 + $0x54]]
    %v1775 = vstv %s1774
    %v1776 = vmul.f32 %v77, %v1775
    %v1777 = vmul.f32 %v78, %v1775
    %v1778 = vadd.f32 %v1772, %v1776
    %v1779 = vadd.f32 %v1773, %v1777
    %s1780 = sld [smem:[#allocation2 + $0x55]]
    %v1781 = vstv %s1780
    %v1782 = vmul.f32 %v86, %v1781
    %v1783 = vmul.f32 %v87, %v1781
    %v1784 = vadd.f32 %v1778, %v1782
    %v1785 = vadd.f32 %v1779, %v1783
    %s1786 = sld [smem:[#allocation2 + $0x56]]
    %v1787 = vstv %s1786
    %v1788 = vmul.f32 %v77, %v1787
    %v1789 = vmul.f32 %v78, %v1787
    %1792 = vrot.lane.b32.xlu0 %v1788, 127
    %v1793 = vpop.permute.xlu0 %1792
    %1794 = vrot.lane.b32.xlu0 %v1789, 127
    %v1795 = vpop.permute.xlu0 %1794
    %v1796 = vsel %vm70, %v1793, %v1795
    %v1799 = vadd.f32 %v1784, %v1796
    %v1800 = vadd.f32 %v1785, %v1795
    %s1801 = sld [smem:[#allocation2 + $0x57]]
    %v1802 = vstv %s1801
    %v1803 = vmul.f32 %v45, %v1802
    %v1804 = vmul.f32 %v46, %v1802
    %1807 = vrot.lane.b32.xlu0 %v1803, 113
    %v1808 = vpop.permute.xlu0 %1807
    %1809 = vrot.lane.b32.xlu0 %v1804, 113
    %v1810 = vpop.permute.xlu0 %1809
    %v1811 = vsel %vm119, %v1808, %v1810
    %v1814 = vadd.f32 %v1799, %v1811
    %v1815 = vadd.f32 %v1800, %v1810
    %s1816 = sld [smem:[#allocation2 + $0x58]]
    %v1817 = vstv %s1816
    %v1818 = vmul.f32 %v52, %v1817
    %v1819 = vmul.f32 %v53, %v1817
    %1822 = vrot.lane.b32.xlu0 %v1818, 113
    %v1823 = vpop.permute.xlu0 %1822
    %1824 = vrot.lane.b32.xlu0 %v1819, 113
    %v1825 = vpop.permute.xlu0 %1824
    %v1826 = vsel %vm119, %v1823, %v1825
    %v1829 = vadd.f32 %v1814, %v1826
    %v1830 = vadd.f32 %v1815, %v1825
    %s1831 = sld [smem:[#allocation2 + $0x59]]
    %v1832 = vstv %s1831
    %v1833 = vmul.f32 %v45, %v1832
    %v1834 = vmul.f32 %v46, %v1832
    %1837 = vrot.lane.b32.xlu0 %v1833, 112
    %v1838 = vpop.permute.xlu0 %1837
    %1839 = vrot.lane.b32.xlu0 %v1834, 112
    %v1840 = vpop.permute.xlu0 %1839
    %v1841 = vsel %vm150, %v1838, %v1840
    %v1844 = vadd.f32 %v1829, %v1841
    %v1845 = vadd.f32 %v1830, %v1840
    %s1846 = sld [smem:[#allocation4 + $0x9]]
    %v1847 = vstv %s1846
    %v1848 = vadd.f32 %v1844, %v1847
    %v1849 = vadd.f32 %v1845, %v1847
    %v1850 = vmax.f32 %v1848, 0.0
    %v1851 = vmax.f32 %v1849, 0.0
    %s1852 = scalar_lea.vmem %s3, 288
    %v1853 = vld [vmem:[%s1852] sm:$0xff]
    %v1854 = vld [vmem:[%s1852 + $0x8] sm:$0xff]
    %v1855 = vld [vmem:[%s1852 + $0x10] sm:$0x3]
    %v1856 = vld [vmem:[%s1852 + $0x18] sm:$0x3]
    %v1858 = vsel %vm274, %v1851, 0
    %v1861 = vsel %vm274, %v1854, 0
    %v1864 = vsel %vm274, %v1856, 0
    %1866 = vmatprep.subr.mxu0 0.0
    %1867 = vmatpush1.xpose.msra.mxu0 0.0
    %1868 = vmatprep.subr.mxu0 0.0
    %1869 = vmatpush1.xpose.msra.mxu0 0.0
    %1870 = vmatprep.subr.mxu0 0.0
    %1871 = vmatpush1.xpose.msra.mxu0 0.0
    %1872 = vmatprep.subr.mxu0 0.0
    %1873 = vmatpush1.xpose.msra.mxu0 0.0
    %1874 = vmatprep.subr.mxu0 0.0
    %1875 = vmatpush1.xpose.msra.mxu0 0.0
    %1876 = vmatprep.subr.mxu0 0.0
    %1877 = vmatpush1.xpose.msra.mxu0 0.0
    %1878 = vmatprep.subr.mxu0 0.0
    %1879 = vmatpush1.xpose.msra.mxu0 0.0
    %1880 = vmatprep.subr.mxu0 0.0
    %1881 = vmatpush1.xpose.msra.mxu0 0.0
    %1882 = vmatprep.subr.mxu0 0.0
    %1883 = vmatpush1.xpose.msra.mxu0 0.0
    %1884 = vmatprep.subr.mxu0 0.0
    %1885 = vmatpush1.xpose.msra.mxu0 0.0
    %1886 = vmatprep.subr.mxu0 0.0
    %1887 = vmatpush1.xpose.msra.mxu0 0.0
    %1888 = vmatprep.subr.mxu0 0.0
    %1889 = vmatpush1.xpose.msra.mxu0 0.0
    %1890 = vmatprep.subr.mxu0 0.0
    %1891 = vmatpush1.xpose.msra.mxu0 0.0
    %1892 = vmatprep.subr.mxu0 0.0
    %1893 = vmatpush1.xpose.msra.mxu0 0.0
    %1894 = vmatprep.subr.mxu0 %v1864
    %1895 = vmatpush1.xpose.msra.mxu0 %v1855
    %1896 = vmatprep.subr.mxu0 %v1861
    %1897 = vmatpush1.xpose.msra.mxu0 %v1853
    %1898 = vmatprep.subr.mxu0 0.0
    %1899 = vmatpush2.xpose.msra.mxu0 0.0
    %1900 = vmatprep.subr.mxu0 0.0
    %1901 = vmatpush2.xpose.msra.mxu0 0.0
    %1902 = vmatprep.subr.mxu0 0.0
    %1903 = vmatpush2.xpose.msra.mxu0 0.0
    %1904 = vmatprep.subr.mxu0 0.0
    %1905 = vmatpush2.xpose.msra.mxu0 0.0
    %1906 = vmatprep.subr.mxu0 0.0
    %1907 = vmatpush2.xpose.msra.mxu0 0.0
    %1908 = vmatprep.subr.mxu0 0.0
    %1909 = vmatpush2.xpose.msra.mxu0 0.0
    %1910 = vmatprep.subr.mxu0 0.0
    %1911 = vmatpush2.xpose.msra.mxu0 0.0
    %1912 = vmatprep.subr.mxu0 0.0
    %1913 = vmatpush2.xpose.msra.mxu0 0.0
    %1914 = vmatprep.subr.mxu0 0.0
    %1915 = vmatpush2.xpose.msra.mxu0 0.0
    %1916 = vmatprep.subr.mxu0 0.0
    %1917 = vmatpush2.xpose.msra.mxu0 0.0
    %1918 = vmatprep.subr.mxu0 0.0
    %1919 = vmatpush2.xpose.msra.mxu0 0.0
    %1920 = vmatprep.subr.mxu0 0.0
    %1921 = vmatpush2.xpose.msra.mxu0 0.0
    %1922 = vmatprep.subr.mxu0 0.0
    %1923 = vmatpush2.xpose.msra.mxu0 0.0
    %1924 = vmatprep.subr.mxu0 0.0
    %1925 = vmatpush2.xpose.msra.mxu0 0.0
    %1926 = vmatprep.subr.mxu0 0.0
    %1927 = vmatpush2.xpose.msra.mxu0 0.0
    %1928 = vmatprep.subr.mxu0 0.0
    %1929 = vmatpush2.xpose.msra.mxu0 0.0
    %1930 = vmatprep.mubr.f32.mxu0 %v1858
    %1931 = vmatmul.mubr.f32.gmra.mxu0 %v1850
    %v1932 = vpop.f32.mrf.mxu0
    %v1933 = vadd.f32 0.0, %v1932
    %v1934 = vpop.f32.mrf.mxu0
    %1935 = vdwg.mxu0
    %v1936 = vadd.f32 %v1748, %v1933
    %v1937 = vld [vmem:[%s4] sm:$0x1]
    %v1939 = vlaneseq
    %v1940 = vshrl.u32 %v1939, 7
    %v1941 = vsub.s32 0, %v1940
    %v1942 = vrot.slane %v1937, %v1941
    %v1944 = vadd.f32 %v1936, %v1942
    %vm1945 = vcmask 80896
    %v1946 = vsel %vm1945, %v1944, -inf
    %1947 = vmax.xlane.f32.xlu0 %v1946
    %v1948 = vpop.xlane.xlu0 %1947
    %v1949 = vsub.f32 %v1944, %v1948
    %v1950 = vmul.f32 %v1949, 1.442695
    %v1951 = vpow.pop %v1950
    %v1952 = vsel %vm1945, %v1951, 0.0
    %1953 = vadd.xlane.f32.xlu0 %v1952
    %v1954 = vpop.xlane.xlu0 %1953
    %v1955 = vlog2.pop %v1954
    %v1956 = vmul.f32 %v1955, 0.6931472
    %v1957 = vsub.f32 %v1949, %v1956
    %1958 = vst.msk [vmem:[%s5] sm:$0xff] %vm1945, %v1957
    // Predicated region
    $region30: #{simple_cnn_forward.1} parent=1 // pred_check
      _
    $region31: #{simple_cnn_forward.1} parent=1 // pred_check_branch
      %1960 = sbr.rel (0) target = $region33
    $region32: #{simple_cnn_forward.1} parent=1 // pred_region
      _
    $region33: #{simple_cnn_forward.1} parent=1 // pred_fallthru
      _
    // Predicated region
    $region34: #{simple_cnn_forward.1} parent=1 // pred_check
      _
    $region35: #{simple_cnn_forward.1} parent=1 // pred_check_branch
      %1962 = sbr.rel (0) target = $region37
    $region36: #{simple_cnn_forward.1} parent=1 // pred_region
      _
    $region37: #{simple_cnn_forward.1} parent=1 // pred_fallthru
      _
    %1963 = vsyncpa [#allocation3], 1
    %1964 = vsyncpa [#allocation5], 1

</llo_original>
